<compile_context>
chip_gen: v5e
topology: v5e:2x2
jax: 0.10.0
libtpu: 0.0.40
codegen_flags: <defaults>
</compile_context>

<pallas_src>
import functools

import jax
import jax.numpy as jnp
from jax import lax
from jax.experimental import pallas as pl
from jax.experimental.pallas import tpu as pltpu


def _bottleneck_kernel(x_ref, xh_ref, w1_ref, b1_ref, w2_ref, b2_ref,
                       w3_ref, b3_ref, out_ref, h1p_ref, patch_ref, *,
                       Th, W, C, Ci, compute_dtype):
    """One (batch image, Th-row tile) step of the ENet regular bottleneck."""
    i = pl.program_id(1)
    nt = pl.num_programs(1)
    cdt = compute_dtype
    TW = Th * W

    x_pix = x_ref[...]                                  # (Th*W, C) f32, pixel-major

    # ---- ext_conv1: 1x1 projection (+ folded BN) + ReLU ---------------------
    def conv1(v):
        y = jnp.dot(v.astype(cdt), w1_ref[...],
                    preferred_element_type=jnp.float32) + b1_ref[...]
        return jnp.maximum(y, 0.0)

    h1_main = conv1(x_pix)                              # (Th*W, Ci)
    h1_halo = conv1(xh_ref[0])                          # (2*W, Ci): [0,W)=top row, [W,2W)=bottom row
    # Halo rows outside the image must contribute zeros (conv2's zero padding),
    # applied AFTER conv1 because relu(b1) != 0 in general.
    h1_top = jnp.where(i > 0, h1_halo[:W], 0.0)
    h1_bot = jnp.where(i < nt - 1, h1_halo[W:], 0.0)

    # ---- zero-padded h1 slab: (Th+2, W+2, Ci) -------------------------------
    # Only the two 1-pixel border columns are zeroed; interior + halo rows are
    # plain stores of freshly computed values (no full-buffer zero fill).
    zcol = jnp.zeros((Th + 2, 1, Ci), jnp.float32)
    h1p_ref[:, 0:1, :] = zcol
    h1p_ref[:, W + 1:W + 2, :] = zcol
    h1p_ref[0:1, 1:W + 1, :] = h1_top.reshape(1, W, Ci)
    h1p_ref[Th + 1:Th + 2, 1:W + 1, :] = h1_bot.reshape(1, W, Ci)
    h1p_ref[1:Th + 1, 1:W + 1, :] = h1_main.reshape(Th, W, Ci)

    # ---- ext_conv2: 3x3 / pad 1 as ONE im2col matmul (K = 9*Ci) -------------
    for ky in range(3):
        for kx in range(3):
            tap = ky * 3 + kx
            win = h1p_ref[ky:ky + Th, kx:kx + W, :]     # (Th, W, Ci)
            patch_ref[:, tap * Ci:(tap + 1) * Ci] = win.reshape(TW, Ci)
    h2 = jnp.dot(patch_ref[...].astype(cdt), w2_ref[...],
                 preferred_element_type=jnp.float32) + b2_ref[...]
    h2 = jnp.maximum(h2, 0.0)                           # (Th*W, Ci)

    # ---- ext_conv3: 1x1 expansion (+ folded BN) + ReLU ----------------------
    h3 = jnp.dot(h2.astype(cdt), w3_ref[...],
                 preferred_element_type=jnp.float32) + b3_ref[...]
    h3 = jnp.maximum(h3, 0.0)                           # (Th*W, C)

    # TODO(synk): PReLU (relu=False), Dropout2d with p>0 in training mode,
    # training-mode BatchNorm statistics, and the asymmetric / dilated conv2
    # variants are not implemented here.
    out_ref[...] = jnp.maximum(x_pix + h3, 0.0)


def _pick_row_tile(H, W, C, Ci, budget_bytes=2 << 20):
    """Largest row tile Th (H % Th == 0, (Th*W) % 8 == 0) whose rough per-stage
    f32 footprint fits the budget.  Budget sized for the smallest scoped-VMEM
    generation (v7x); pass row_tile explicitly to override."""
    per_row = 4 * W * (4 * C + 12 * Ci)          # rough f32 bytes per output row

    def ok(th):
        return H % th == 0 and (th * W) % 8 == 0

    if ok(H) and H * per_row <= budget_bytes:
        return H
    best = None
    for th in range(1, H + 1):
        if ok(th) and th * per_row <= budget_bytes:
            best = th
    if best is not None:
        return best
    for th in range(1, H + 1):                   # nothing fits: smallest legal tile
        if ok(th):
            return th
    raise ValueError(f"no legal row tile for H={H}, W={W}")


def regular_bottleneck_nhwc(x_nhwc, params, *, row_tile=None,
                            compute_dtype=jnp.bfloat16,
                            vmem_tile_budget_bytes=2 << 20):
    """Fused ENet regular-bottleneck forward, NHWC in / NHWC out (no transposes)."""
    N, H, W, C = x_nhwc.shape
    Ci = params["w1"].shape[1]
    if row_tile is None:
        row_tile = _pick_row_tile(H, W, C, Ci, vmem_tile_budget_bytes)
    Th = int(row_tile)
    if H % Th != 0:
        raise ValueError(f"row_tile={Th} must divide H={H}")
    if (Th * W) % 8 != 0:
        raise ValueError(f"row_tile*W={Th * W} must be a multiple of 8")
    nt = H // Th
    TW = Th * W
    WC = W * C

    xf = x_nhwc.astype(jnp.float32)
    x_pix = xf.reshape(N * H * W, C)             # pixel-major, channel-minor

    # Per-(image, tile) halo rows: image rows i*Th-1 and i*Th+Th, zero-filled
    # at the image border.  Shape (N*nt, 2*W, C): rows [0,W)=top, [W,2W)=bottom.
    x_rows = xf.reshape(N, H, WC)
    zrow = jnp.zeros((N, 1, WC), jnp.float32)
    top = jnp.concatenate([zrow, x_rows[:, Th - 1:H - 1:Th]], axis=1)   # (N, nt, WC)
    bot = jnp.concatenate([x_rows[:, Th:H:Th], zrow], axis=1)           # (N, nt, WC)
    halo = jnp.stack([top, bot], axis=2).reshape(N * nt, 2 * W, C)

    w1 = params["w1"].astype(compute_dtype)
    w2 = params["w2"].astype(compute_dtype)
    w3 = params["w3"].astype(compute_dtype)
    b1, b2, b3 = params["b1"], params["b2"], params["b3"]               # f32 biases

    kernel = functools.partial(_bottleneck_kernel, Th=Th, W=W, C=C, Ci=Ci,
                               compute_dtype=compute_dtype)

    flops = 2 * N * H * W * (C * Ci + 9 * Ci * Ci + Ci * C)
    bytes_accessed = 4 * (2 * N * H * W * C + N * nt * 2 * W * C) + sum(
        int(a.size) * a.dtype.itemsize for a in (w1, w2, w3, b1, b2, b3))

    def full(a):
        return pl.BlockSpec(a.shape, lambda n, i: (0,) * a.ndim)

    out_pix = pl.pallas_call(
        kernel,
        out_shape=jax.ShapeDtypeStruct((N * H * W, C), jnp.float32),
        grid=(N, nt),
        in_specs=[
            # main Th-row tile of x (residual + conv1 input), pixel-major
            pl.BlockSpec((TW, C), lambda n, i: (n * nt + i, 0)),
            # per-tile halo rows (top, bottom), zero-filled at the image border
            pl.BlockSpec((1, 2 * W, C), lambda n, i: (n * nt + i, 0, 0)),
            full(w1), full(b1), full(w2), full(b2), full(w3), full(b3),
        ],
        out_specs=pl.BlockSpec((TW, C), lambda n, i: (n * nt + i, 0)),
        scratch_shapes=[
            pltpu.VMEM((Th + 2, W + 2, Ci), jnp.float32),   # padded h1 slab
            pltpu.VMEM((TW, 9 * Ci), jnp.float32),          # im2col patches
        ],
        compiler_params=pltpu.CompilerParams(
            dimension_semantics=("parallel", "parallel"),
            vmem_limit_bytes=32 * 1024 * 1024),
        cost_estimate=pl.CostEstimate(flops=flops, transcendentals=0,
                                      bytes_accessed=bytes_accessed),
    )(x_pix, halo, w1, b1, w2, b2, w3, b3)
    return out_pix.reshape(N, H, W, C)


def regular_bottleneck(x_nchw, params, **kwargs):
    """PyTorch-convention adapter (NCHW in / NCHW out).

    Prefer `regular_bottleneck_nhwc` end-to-end: the two transposes here are
    pure layout traffic on a memory-bound op and are only kept so the public
    signature matches the torch module."""
    x_nhwc = jnp.transpose(x_nchw, (0, 2, 3, 1))
    out = regular_bottleneck_nhwc(x_nhwc, params, **kwargs)
    return jnp.transpose(out, (0, 3, 1, 2))


def _fold_bn(w_io, gamma, beta, mean, var, eps=1e-5):
    """Fold inference BatchNorm into a conv with weight layout (..., in, out)."""
    scale = gamma / jnp.sqrt(var + eps)               # (out,)
    w_eff = w_io * scale                              # broadcast over out axis
    b_eff = beta - mean * scale
    return w_eff.astype(jnp.float32), b_eff.astype(jnp.float32)


def make_params(key, channels, internal_ratio=4):
    """Deterministic synthetic parameters (conv weights + BN stats), BN folded."""
    Ci = channels // internal_ratio
    ks = jax.random.split(key, 15)

    def bn_params(k0, k1, k2, k3, c):
        gamma = 1.0 + 0.1 * jax.random.normal(ks[k0], (c,), jnp.float32)
        beta = 0.1 * jax.random.normal(ks[k1], (c,), jnp.float32)
        mean = 0.1 * jax.random.normal(ks[k2], (c,), jnp.float32)
        var = jnp.abs(jax.random.normal(ks[k3], (c,), jnp.float32)) + 0.5
        return gamma, beta, mean, var

    # ext_conv1: Conv2d(C, Ci, 1) kept as (in, out).
    w1 = 0.3 * jax.random.normal(ks[0], (channels, Ci), jnp.float32)
    w1, b1 = _fold_bn(w1, *bn_params(1, 2, 3, 4, Ci))

    # ext_conv2: Conv2d(Ci, Ci, 3, padding=1) kept as an im2col matrix
    # (9*Ci, Ci) flattened in (ky, kx, in) order.
    w2 = 0.3 * jax.random.normal(ks[5], (3, 3, Ci, Ci), jnp.float32)   # HWIO
    w2, b2 = _fold_bn(w2, *bn_params(6, 7, 8, 9, Ci))
    w2 = w2.reshape(9 * Ci, Ci)

    # ext_conv3: Conv2d(Ci, C, 1) kept as (in, out).
    w3 = 0.3 * jax.random.normal(ks[10], (Ci, channels), jnp.float32)
    w3, b3 = _fold_bn(w3, *bn_params(11, 12, 13, 14, channels))

    return {
        "w1": w1, "b1": b1.reshape(1, Ci),
        "w2": w2, "b2": b2.reshape(1, Ci),
        "w3": w3, "b3": b3.reshape(1, channels),
    }


def reference_bottleneck(x_nchw, params):
    """Pure-JAX reference (lax convolutions, highest precision)."""
    x = jnp.transpose(x_nchw, (0, 2, 3, 1)).astype(jnp.float32)    # NHWC
    Ci = params["w1"].shape[1]
    prec = lax.Precision.HIGHEST

    w1 = params["w1"][None, None]                                  # (1,1,C,Ci)
    dn1 = lax.conv_dimension_numbers(x.shape, w1.shape, ("NHWC", "HWIO", "NHWC"))
    h1 = jax.nn.relu(lax.conv_general_dilated(x, w1, (1, 1), "VALID",
                                              dimension_numbers=dn1,
                                              precision=prec) + params["b1"][0])

    w2 = params["w2"].reshape(3, 3, Ci, Ci)                        # HWIO
    dn2 = lax.conv_dimension_numbers(h1.shape, w2.shape, ("NHWC", "HWIO", "NHWC"))
    h2 = jax.nn.relu(lax.conv_general_dilated(h1, w2, (1, 1), [(1, 1), (1, 1)],
                                              dimension_numbers=dn2,
                                              precision=prec) + params["b2"][0])

    w3 = params["w3"][None, None]                                  # (1,1,Ci,C)
    dn3 = lax.conv_dimension_numbers(h2.shape, w3.shape, ("NHWC", "HWIO", "NHWC"))
    h3 = jax.nn.relu(lax.conv_general_dilated(h2, w3, (1, 1), "VALID",
                                              dimension_numbers=dn3,
                                              precision=prec) + params["b3"][0])

    out = jax.nn.relu(x + h3)
    return jnp.transpose(out, (0, 3, 1, 2))


if __name__ == "__main__":
    key = jax.random.PRNGKey(0)
    k_x, k_p = jax.random.split(key)

    N, C, H, W = 2, 16, 16, 16          # channels=16, internal_ratio=4 -> Ci=4
    x = jax.random.normal(k_x, (N, C, H, W), jnp.float32)
    params = make_params(k_p, C, internal_ratio=4)

    ref = jax.block_until_ready(reference_bottleneck(x, params))

    # f32 matmuls, forced multi-row-tile grid (exercises the 3x3 halo path).
    out_f32 = jax.block_until_ready(
        regular_bottleneck(x, params, row_tile=8, compute_dtype=jnp.float32))
    assert out_f32.shape == (N, C, H, W)
    err32 = float(jnp.max(jnp.abs(out_f32 - ref)))
    assert bool(jnp.allclose(out_f32, ref, atol=2e-2, rtol=2e-2)), \
        f"f32 max abs err {err32}"

    # bf16 matmul operands / f32 accumulation, auto-picked row tile (single tile).
    out_bf16 = jax.block_until_ready(
        regular_bottleneck(x, params, compute_dtype=jnp.bfloat16))
    errbf = float(jnp.max(jnp.abs(out_bf16 - ref)))
    assert bool(jnp.allclose(out_bf16, ref, atol=1e-1, rtol=5e-2)), \
        f"bf16 max abs err {errbf}"

    print("KERNEL_OK")
</pallas_src>

<mosaic_0001>
module attributes {stable_mosaic.version = 11 : i64} {
  func.func @_bottleneck_kernel(%arg0: i32, %arg1: i32, %arg2: memref<128x16xf32, #tpu.memory_space<vmem>>, %arg3: memref<1x32x16xf32, #tpu.memory_space<vmem>>, %arg4: memref<16x4xf32, #tpu.memory_space<vmem>>, %arg5: memref<1x4xf32, #tpu.memory_space<vmem>>, %arg6: memref<36x4xf32, #tpu.memory_space<vmem>>, %arg7: memref<1x4xf32, #tpu.memory_space<vmem>>, %arg8: memref<4x16xf32, #tpu.memory_space<vmem>>, %arg9: memref<1x16xf32, #tpu.memory_space<vmem>>, %arg10: memref<128x16xf32, #tpu.memory_space<vmem>>, %arg11: memref<10x18x4xf32, #tpu.memory_space<vmem>>, %arg12: memref<128x36xf32, #tpu.memory_space<vmem>>) attributes {dimension_semantics = [#tpu.dimension_semantics<parallel>, #tpu.dimension_semantics<parallel>], iteration_bounds = array<i64: 2, 2>, scalar_prefetch = 0 : i64, scratch_operands = 2 : i64, tpu.core_type = #tpu.core_type<tc>, window_params = [{transform_indices = @transform_0, window_bounds = array<i64: 128, 16>}, {transform_indices = @transform_1, window_bounds = array<i64: 1, 32, 16>}, {pipeline_mode = #tpu.pipeline_mode<synchronous>, transform_indices = @transform_2, window_bounds = array<i64: 16, 4>}, {pipeline_mode = #tpu.pipeline_mode<synchronous>, transform_indices = @transform_3, window_bounds = array<i64: 1, 4>}, {pipeline_mode = #tpu.pipeline_mode<synchronous>, transform_indices = @transform_4, window_bounds = array<i64: 36, 4>}, {pipeline_mode = #tpu.pipeline_mode<synchronous>, transform_indices = @transform_5, window_bounds = array<i64: 1, 4>}, {pipeline_mode = #tpu.pipeline_mode<synchronous>, transform_indices = @transform_6, window_bounds = array<i64: 4, 16>}, {pipeline_mode = #tpu.pipeline_mode<synchronous>, transform_indices = @transform_7, window_bounds = array<i64: 1, 16>}, {transform_indices = @transform_8, window_bounds = array<i64: 128, 16>}]} {
    %c0 = arith.constant 0 : index
    %c0_0 = arith.constant 0 : index
    %0 = vector.load %arg2[%c0, %c0_0] : memref<128x16xf32, #tpu.memory_space<vmem>>, vector<128x16xf32>
    %c0_1 = arith.constant 0 : index
    %c0_2 = arith.constant 0 : index
    %1 = vector.load %arg4[%c0_1, %c0_2] : memref<16x4xf32, #tpu.memory_space<vmem>>, vector<16x4xf32>
    %cst = arith.constant dense<0.000000e+00> : vector<128x4xf32>
    %2 = tpu.matmul %0, %1, %cst {dimension_numbers = #tpu.dot_dimension_numbers<[1], [0], [0], [1], [0, 0, 1, 1], [], []>} : vector<128x16xf32>, vector<16x4xf32>, vector<128x4xf32> -> vector<128x4xf32>
    %c0_3 = arith.constant 0 : index
    %c0_4 = arith.constant 0 : index
    %3 = vector.load %arg5[%c0_3, %c0_4] : memref<1x4xf32, #tpu.memory_space<vmem>>, vector<1x4xf32>
    %4 = vector.broadcast %3 : vector<1x4xf32> to vector<128x4xf32>
    %5 = arith.addf %2, %4 : vector<128x4xf32>
    %cst_5 = arith.constant 0.000000e+00 : f32
    %6 = vector.broadcast %cst_5 : f32 to vector<128x4xf32>
    %7 = arith.maximumf %5, %6 : vector<128x4xf32>
    %c0_6 = arith.constant 0 : index
    %c0_7 = arith.constant 0 : index
    %c0_8 = arith.constant 0 : index
    %8 = vector.load %arg3[%c0_6, %c0_7, %c0_8] : memref<1x32x16xf32, #tpu.memory_space<vmem>>, vector<1x32x16xf32>
    %9 = vector.shape_cast %8 : vector<1x32x16xf32> to vector<32x16xf32>
    %c0_9 = arith.constant 0 : index
    %c0_10 = arith.constant 0 : index
    %10 = vector.load %arg4[%c0_9, %c0_10] : memref<16x4xf32, #tpu.memory_space<vmem>>, vector<16x4xf32>
    %cst_11 = arith.constant dense<0.000000e+00> : vector<32x4xf32>
    %11 = tpu.matmul %9, %10, %cst_11 {dimension_numbers = #tpu.dot_dimension_numbers<[1], [0], [0], [1], [0, 0, 1, 1], [], []>} : vector<32x16xf32>, vector<16x4xf32>, vector<32x4xf32> -> vector<32x4xf32>
    %c0_12 = arith.constant 0 : index
    %c0_13 = arith.constant 0 : index
    %12 = vector.load %arg5[%c0_12, %c0_13] : memref<1x4xf32, #tpu.memory_space<vmem>>, vector<1x4xf32>
    %13 = vector.broadcast %12 : vector<1x4xf32> to vector<32x4xf32>
    %14 = arith.addf %11, %13 : vector<32x4xf32>
    %cst_14 = arith.constant 0.000000e+00 : f32
    %15 = vector.broadcast %cst_14 : f32 to vector<32x4xf32>
    %16 = arith.maximumf %14, %15 : vector<32x4xf32>
    %c0_i32 = arith.constant 0 : i32
    %17 = arith.cmpi sgt, %arg1, %c0_i32 : i32
    %18 = vector.extract_strided_slice %16 {offsets = [0, 0], sizes = [16, 4], strides = [1, 1]} : vector<32x4xf32> to vector<16x4xf32>
    %cst_15 = arith.constant 0.000000e+00 : f32
    %19 = vector.broadcast %cst_15 : f32 to vector<16x4xf32>
    %20 = arith.select %17, %18, %19 : vector<16x4xf32>
    %c1_i32 = arith.constant 1 : i32
    %21 = arith.cmpi slt, %arg1, %c1_i32 : i32
    %22 = vector.extract_strided_slice %16 {offsets = [16, 0], sizes = [16, 4], strides = [1, 1]} : vector<32x4xf32> to vector<16x4xf32>
    %cst_16 = arith.constant 0.000000e+00 : f32
    %23 = vector.broadcast %cst_16 : f32 to vector<16x4xf32>
    %24 = arith.select %21, %22, %23 : vector<16x4xf32>
    %cst_17 = arith.constant 0.000000e+00 : f32
    %25 = vector.broadcast %cst_17 : f32 to vector<10x1x4xf32>
    %c0_18 = arith.constant 0 : index
    %c0_19 = arith.constant 0 : index
    %c0_20 = arith.constant 0 : index
    %26 = vector.load %arg11[%c0_18, %c0_19, %c0_20] : memref<10x18x4xf32, #tpu.memory_space<vmem>>, vector<10x1x4xf32>
    tpu.vector_store %arg11[%c0_18, %c0_19, %c0_20], %25 {strides = array<i32>} : memref<10x18x4xf32, #tpu.memory_space<vmem>>, vector<10x1x4xf32>,
    %c0_21 = arith.constant 0 : index
    %c17 = arith.constant 17 : index
    %c0_22 = arith.constant 0 : index
    %27 = vector.load %arg11[%c0_21, %c17, %c0_22] : memref<10x18x4xf32, #tpu.memory_space<vmem>>, vector<10x1x4xf32>
    tpu.vector_store %arg11[%c0_21, %c17, %c0_22], %25 {strides = array<i32>} : memref<10x18x4xf32, #tpu.memory_space<vmem>>, vector<10x1x4xf32>,
    %28 = vector.shape_cast %20 : vector<16x4xf32> to vector<1x16x4xf32>
    %c0_23 = arith.constant 0 : index
    %c1 = arith.constant 1 : index
    %c0_24 = arith.constant 0 : index
    %29 = vector.load %arg11[%c0_23, %c1, %c0_24] : memref<10x18x4xf32, #tpu.memory_space<vmem>>, vector<1x16x4xf32>
    tpu.vector_store %arg11[%c0_23, %c1, %c0_24], %28 {strides = array<i32>} : memref<10x18x4xf32, #tpu.memory_space<vmem>>, vector<1x16x4xf32>,
    %30 = vector.shape_cast %24 : vector<16x4xf32> to vector<1x16x4xf32>
    %c9 = arith.constant 9 : index
    %c1_25 = arith.constant 1 : index
    %c0_26 = arith.constant 0 : index
    %31 = vector.load %arg11[%c9, %c1_25, %c0_26] : memref<10x18x4xf32, #tpu.memory_space<vmem>>, vector<1x16x4xf32>
    tpu.vector_store %arg11[%c9, %c1_25, %c0_26], %30 {strides = array<i32>} : memref<10x18x4xf32, #tpu.memory_space<vmem>>, vector<1x16x4xf32>,
    %32 = vector.shape_cast %7 : vector<128x4xf32> to vector<8x16x4xf32>
    %c1_27 = arith.constant 1 : index
    %c1_28 = arith.constant 1 : index
    %c0_29 = arith.constant 0 : index
    %33 = vector.load %arg11[%c1_27, %c1_28, %c0_29] : memref<10x18x4xf32, #tpu.memory_space<vmem>>, vector<8x16x4xf32>
    tpu.vector_store %arg11[%c1_27, %c1_28, %c0_29], %32 {strides = array<i32>} : memref<10x18x4xf32, #tpu.memory_space<vmem>>, vector<8x16x4xf32>,
    %c0_30 = arith.constant 0 : index
    %c0_31 = arith.constant 0 : index
    %c0_32 = arith.constant 0 : index
    %34 = vector.load %arg11[%c0_30, %c0_31, %c0_32] : memref<10x18x4xf32, #tpu.memory_space<vmem>>, vector<8x16x4xf32>
    %35 = vector.shape_cast %34 : vector<8x16x4xf32> to vector<128x4xf32>
    %c0_33 = arith.constant 0 : index
    %c0_34 = arith.constant 0 : index
    %36 = vector.load %arg12[%c0_33, %c0_34] : memref<128x36xf32, #tpu.memory_space<vmem>>, vector<128x4xf32>
    tpu.vector_store %arg12[%c0_33, %c0_34], %35 {strides = array<i32>} : memref<128x36xf32, #tpu.memory_space<vmem>>, vector<128x4xf32>,
    %c0_35 = arith.constant 0 : index
    %c1_36 = arith.constant 1 : index
    %c0_37 = arith.constant 0 : index
    %37 = vector.load %arg11[%c0_35, %c1_36, %c0_37] : memref<10x18x4xf32, #tpu.memory_space<vmem>>, vector<8x16x4xf32>
    %38 = vector.shape_cast %37 : vector<8x16x4xf32> to vector<128x4xf32>
    %c0_38 = arith.constant 0 : index
    %c4 = arith.constant 4 : index
    %39 = vector.load %arg12[%c0_38, %c4] : memref<128x36xf32, #tpu.memory_space<vmem>>, vector<128x4xf32>
    tpu.vector_store %arg12[%c0_38, %c4], %38 {strides = array<i32>} : memref<128x36xf32, #tpu.memory_space<vmem>>, vector<128x4xf32>,
    %c0_39 = arith.constant 0 : index
    %c2 = arith.constant 2 : index
    %c0_40 = arith.constant 0 : index
    %40 = vector.load %arg11[%c0_39, %c2, %c0_40] : memref<10x18x4xf32, #tpu.memory_space<vmem>>, vector<8x16x4xf32>
    %41 = vector.shape_cast %40 : vector<8x16x4xf32> to vector<128x4xf32>
    %c0_41 = arith.constant 0 : index
    %c8 = arith.constant 8 : index
    %42 = vector.load %arg12[%c0_41, %c8] : memref<128x36xf32, #tpu.memory_space<vmem>>, vector<128x4xf32>
    tpu.vector_store %arg12[%c0_41, %c8], %41 {strides = array<i32>} : memref<128x36xf32, #tpu.memory_space<vmem>>, vector<128x4xf32>,
    %c1_42 = arith.constant 1 : index
    %c0_43 = arith.constant 0 : index
    %c0_44 = arith.constant 0 : index
    %43 = vector.load %arg11[%c1_42, %c0_43, %c0_44] : memref<10x18x4xf32, #tpu.memory_space<vmem>>, vector<8x16x4xf32>
    %44 = vector.shape_cast %43 : vector<8x16x4xf32> to vector<128x4xf32>
    %c0_45 = arith.constant 0 : index
    %c12 = arith.constant 12 : index
    %45 = vector.load %arg12[%c0_45, %c12] : memref<128x36xf32, #tpu.memory_space<vmem>>, vector<128x4xf32>
    tpu.vector_store %arg12[%c0_45, %c12], %44 {strides = array<i32>} : memref<128x36xf32, #tpu.memory_space<vmem>>, vector<128x4xf32>,
    %c1_46 = arith.constant 1 : index
    %c1_47 = arith.constant 1 : index
    %c0_48 = arith.constant 0 : index
    %46 = vector.load %arg11[%c1_46, %c1_47, %c0_48] : memref<10x18x4xf32, #tpu.memory_space<vmem>>, vector<8x16x4xf32>
    %47 = vector.shape_cast %46 : vector<8x16x4xf32> to vector<128x4xf32>
    %c0_49 = arith.constant 0 : index
    %c16 = arith.constant 16 : index
    %48 = vector.load %arg12[%c0_49, %c16] : memref<128x36xf32, #tpu.memory_space<vmem>>, vector<128x4xf32>
    tpu.vector_store %arg12[%c0_49, %c16], %47 {strides = array<i32>} : memref<128x36xf32, #tpu.memory_space<vmem>>, vector<128x4xf32>,
    %c1_50 = arith.constant 1 : index
    %c2_51 = arith.constant 2 : index
    %c0_52 = arith.constant 0 : index
    %49 = vector.load %arg11[%c1_50, %c2_51, %c0_52] : memref<10x18x4xf32, #tpu.memory_space<vmem>>, vector<8x16x4xf32>
    %50 = vector.shape_cast %49 : vector<8x16x4xf32> to vector<128x4xf32>
    %c0_53 = arith.constant 0 : index
    %c20 = arith.constant 20 : index
    %51 = vector.load %arg12[%c0_53, %c20] : memref<128x36xf32, #tpu.memory_space<vmem>>, vector<128x4xf32>
    tpu.vector_store %arg12[%c0_53, %c20], %50 {strides = array<i32>} : memref<128x36xf32, #tpu.memory_space<vmem>>, vector<128x4xf32>,
    %c2_54 = arith.constant 2 : index
    %c0_55 = arith.constant 0 : index
    %c0_56 = arith.constant 0 : index
    %52 = vector.load %arg11[%c2_54, %c0_55, %c0_56] : memref<10x18x4xf32, #tpu.memory_space<vmem>>, vector<8x16x4xf32>
    %53 = vector.shape_cast %52 : vector<8x16x4xf32> to vector<128x4xf32>
    %c0_57 = arith.constant 0 : index
    %c24 = arith.constant 24 : index
    %54 = vector.load %arg12[%c0_57, %c24] : memref<128x36xf32, #tpu.memory_space<vmem>>, vector<128x4xf32>
    tpu.vector_store %arg12[%c0_57, %c24], %53 {strides = array<i32>} : memref<128x36xf32, #tpu.memory_space<vmem>>, vector<128x4xf32>,
    %c2_58 = arith.constant 2 : index
    %c1_59 = arith.constant 1 : index
    %c0_60 = arith.constant 0 : index
    %55 = vector.load %arg11[%c2_58, %c1_59, %c0_60] : memref<10x18x4xf32, #tpu.memory_space<vmem>>, vector<8x16x4xf32>
    %56 = vector.shape_cast %55 : vector<8x16x4xf32> to vector<128x4xf32>
    %c0_61 = arith.constant 0 : index
    %c28 = arith.constant 28 : index
    %57 = vector.load %arg12[%c0_61, %c28] : memref<128x36xf32, #tpu.memory_space<vmem>>, vector<128x4xf32>
    tpu.vector_store %arg12[%c0_61, %c28], %56 {strides = array<i32>} : memref<128x36xf32, #tpu.memory_space<vmem>>, vector<128x4xf32>,
    %c2_62 = arith.constant 2 : index
    %c2_63 = arith.constant 2 : index
    %c0_64 = arith.constant 0 : index
    %58 = vector.load %arg11[%c2_62, %c2_63, %c0_64] : memref<10x18x4xf32, #tpu.memory_space<vmem>>, vector<8x16x4xf32>
    %59 = vector.shape_cast %58 : vector<8x16x4xf32> to vector<128x4xf32>
    %c0_65 = arith.constant 0 : index
    %c32 = arith.constant 32 : index
    %60 = vector.load %arg12[%c0_65, %c32] : memref<128x36xf32, #tpu.memory_space<vmem>>, vector<128x4xf32>
    tpu.vector_store %arg12[%c0_65, %c32], %59 {strides = array<i32>} : memref<128x36xf32, #tpu.memory_space<vmem>>, vector<128x4xf32>,
    %c0_66 = arith.constant 0 : index
    %c0_67 = arith.constant 0 : index
    %61 = vector.load %arg12[%c0_66, %c0_67] : memref<128x36xf32, #tpu.memory_space<vmem>>, vector<128x36xf32>
    %c0_68 = arith.constant 0 : index
    %c0_69 = arith.constant 0 : index
    %62 = vector.load %arg6[%c0_68, %c0_69] : memref<36x4xf32, #tpu.memory_space<vmem>>, vector<36x4xf32>
    %cst_70 = arith.constant dense<0.000000e+00> : vector<128x4xf32>
    %63 = tpu.matmul %61, %62, %cst_70 {dimension_numbers = #tpu.dot_dimension_numbers<[1], [0], [0], [1], [0, 0, 1, 1], [], []>} : vector<128x36xf32>, vector<36x4xf32>, vector<128x4xf32> -> vector<128x4xf32>
    %c0_71 = arith.constant 0 : index
    %c0_72 = arith.constant 0 : index
    %64 = vector.load %arg7[%c0_71, %c0_72] : memref<1x4xf32, #tpu.memory_space<vmem>>, vector<1x4xf32>
    %65 = vector.broadcast %64 : vector<1x4xf32> to vector<128x4xf32>
    %66 = arith.addf %63, %65 : vector<128x4xf32>
    %cst_73 = arith.constant 0.000000e+00 : f32
    %67 = vector.broadcast %cst_73 : f32 to vector<128x4xf32>
    %68 = arith.maximumf %66, %67 : vector<128x4xf32>
    %c0_74 = arith.constant 0 : index
    %c0_75 = arith.constant 0 : index
    %69 = vector.load %arg8[%c0_74, %c0_75] : memref<4x16xf32, #tpu.memory_space<vmem>>, vector<4x16xf32>
    %cst_76 = arith.constant dense<0.000000e+00> : vector<128x16xf32>
    %70 = tpu.matmul %68, %69, %cst_76 {dimension_numbers = #tpu.dot_dimension_numbers<[1], [0], [0], [1], [0, 0, 1, 1], [], []>} : vector<128x4xf32>, vector<4x16xf32>, vector<128x16xf32> -> vector<128x16xf32>
    %c0_77 = arith.constant 0 : index
    %c0_78 = arith.constant 0 : index
    %71 = vector.load %arg9[%c0_77, %c0_78] : memref<1x16xf32, #tpu.memory_space<vmem>>, vector<1x16xf32>
    %72 = vector.broadcast %71 : vector<1x16xf32> to vector<128x16xf32>
    %73 = arith.addf %70, %72 : vector<128x16xf32>
    %cst_79 = arith.constant 0.000000e+00 : f32
    %74 = vector.broadcast %cst_79 : f32 to vector<128x16xf32>
    %75 = arith.maximumf %73, %74 : vector<128x16xf32>
    %76 = arith.addf %0, %75 : vector<128x16xf32>
    %cst_80 = arith.constant 0.000000e+00 : f32
    %77 = vector.broadcast %cst_80 : f32 to vector<128x16xf32>
    %78 = arith.maximumf %76, %77 : vector<128x16xf32>
    %c0_81 = arith.constant 0 : index
    %c0_82 = arith.constant 0 : index
    %79 = vector.load %arg10[%c0_81, %c0_82] : memref<128x16xf32, #tpu.memory_space<vmem>>, vector<128x16xf32>
    tpu.vector_store %arg10[%c0_81, %c0_82], %78 {strides = array<i32>} : memref<128x16xf32, #tpu.memory_space<vmem>>, vector<128x16xf32>,
    return
  }
  func.func @transform_0(%arg0: i32, %arg1: i32) -> (i32, i32) {
    %c2_i32 = arith.constant 2 : i32
    %0 = arith.muli %arg0, %c2_i32 : i32
    %1 = arith.addi %0, %arg1 : i32
    %c0_i32 = arith.constant 0 : i32
    %c0_i32_0 = arith.constant 0 : i32
    return %1, %c0_i32 : i32, i32
  }
  func.func @transform_1(%arg0: i32, %arg1: i32) -> (i32, i32, i32) {
    %c2_i32 = arith.constant 2 : i32
    %0 = arith.muli %arg0, %c2_i32 : i32
    %1 = arith.addi %0, %arg1 : i32
    %c0_i32 = arith.constant 0 : i32
    %c0_i32_0 = arith.constant 0 : i32
    %c0_i32_1 = arith.constant 0 : i32
    return %1, %c0_i32, %c0_i32_0 : i32, i32, i32
  }
  func.func @transform_2(%arg0: i32, %arg1: i32) -> (i32, i32) {
    %c0_i32 = arith.constant 0 : i32
    %c0_i32_0 = arith.constant 0 : i32
    %c0_i32_1 = arith.constant 0 : i32
    return %c0_i32, %c0_i32_0 : i32, i32
  }
  func.func @transform_3(%arg0: i32, %arg1: i32) -> (i32, i32) {
    %c0_i32 = arith.constant 0 : i32
    %c0_i32_0 = arith.constant 0 : i32
    %c0_i32_1 = arith.constant 0 : i32
    return %c0_i32, %c0_i32_0 : i32, i32
  }
  func.func @transform_4(%arg0: i32, %arg1: i32) -> (i32, i32) {
    %c0_i32 = arith.constant 0 : i32
    %c0_i32_0 = arith.constant 0 : i32
    %c0_i32_1 = arith.constant 0 : i32
    return %c0_i32, %c0_i32_0 : i32, i32
  }
  func.func @transform_5(%arg0: i32, %arg1: i32) -> (i32, i32) {
    %c0_i32 = arith.constant 0 : i32
    %c0_i32_0 = arith.constant 0 : i32
    %c0_i32_1 = arith.constant 0 : i32
    return %c0_i32, %c0_i32_0 : i32, i32
  }
  func.func @transform_6(%arg0: i32, %arg1: i32) -> (i32, i32) {
    %c0_i32 = arith.constant 0 : i32
    %c0_i32_0 = arith.constant 0 : i32
    %c0_i32_1 = arith.constant 0 : i32
    return %c0_i32, %c0_i32_0 : i32, i32
  }
  func.func @transform_7(%arg0: i32, %arg1: i32) -> (i32, i32) {
    %c0_i32 = arith.constant 0 : i32
    %c0_i32_0 = arith.constant 0 : i32
    %c0_i32_1 = arith.constant 0 : i32
    return %c0_i32, %c0_i32_0 : i32, i32
  }
  func.func @transform_8(%arg0: i32, %arg1: i32) -> (i32, i32) {
    %c2_i32 = arith.constant 2 : i32
    %0 = arith.muli %arg0, %c2_i32 : i32
    %1 = arith.addi %0, %arg1 : i32
    %c0_i32 = arith.constant 0 : i32
    %c0_i32_0 = arith.constant 0 : i32
    return %1, %c0_i32 : i32, i32
  }
}

</mosaic_0001>

<llo_original>
// kernel: tpu_custom_call.1
$region0: #{tpu_custom_call.1}
  #allocation0 [shape = 'u32[]', space=smem, size = 0x4, offset = 0x4, fixed_abs, tag = 'smem constant byte address 0x4 - core index']
  #allocation1 [shape = 'u32[72,128]{1,0:T(1,128)}', space=vmem, size = 0x9000, scoped, tag = 'internal scratch']
  #allocation2 [shape = 'f32[10,18,4]{2,1,0:T(8,128)}', space=vmem, size = 0x1e000, scoped, tag = 'scratch operand']
  #allocation3 [shape = 'f32[128,36]{1,0:T(8,128)}', space=vmem, size = 0x10000, scoped, tag = 'scratch operand']
  %s0 = inlined_call_operand.vmem [shape: f32[512,16], index: 0, kind: input, shape index: {}]
  %s1 = inlined_call_operand.vmem [shape: f32[4,32,16], index: 1, kind: input, shape index: {}]
  %s2 = inlined_call_operand.vmem [shape: f32[16,4], index: 2, kind: input, shape index: {}]
  %s3 = inlined_call_operand.vmem [shape: f32[1,4], index: 3, kind: input, shape index: {}]
  %s4 = inlined_call_operand.vmem [shape: f32[36,4], index: 4, kind: input, shape index: {}]
  %s5 = inlined_call_operand.vmem [shape: f32[1,4], index: 5, kind: input, shape index: {}]
  %s6 = inlined_call_operand.vmem [shape: f32[4,16], index: 6, kind: input, shape index: {}]
  %s7 = inlined_call_operand.vmem [shape: f32[1,16], index: 7, kind: input, shape index: {}]
  %s8 = inlined_call_operand.vmem [shape: f32[512,16], index: 8, kind: output, shape index: {}]
  %s9 = sld [smem:[#allocation0]]
  $region65: #{tpu_custom_call.1} parent=0
    _
  %s11 = ssub.s32 1, %s9
  %s12 = scalar_select 0, %s11, %s9
  loop: start=0, step=1, limit=6
  $region2: #{tpu_custom_call.1} parent=0 // loop_pre_header
    _
  $region3: #{tpu_custom_call.1} parent=0 // loop_header
    %s14 = sphi 0, %s18
    %p15 = scmp.ge.s32.totalorder %s14, 6
    %s21 = sphi 0, %s33
    %s22 = sphi 0, %s29
    %s23 = sphi 0, %s21
    %s24 = sphi 0, %s22
    %s25 = sphi 0, %s23
    %s26 = sphi 0, %s24
    %s40 = sphi 0, %s42
    %s43 = sphi 0, %s40
    %s44 = sphi 0, %s43
    %s60 = sphi 0, %s44
    %s70 = sphi 0, %s72
    %s73 = sphi 0, %s70
    %s74 = sphi 0, %s73
    %s90 = sphi 0, %s74
    %s94 = sphi 0, %s94
    %s96 = sphi 0, %s94
    %s97 = sphi 0, %s96
    %s111 = sphi 0, %s97
    %s115 = sphi 0, %s115
    %s117 = sphi 0, %s115
    %s118 = sphi 0, %s117
    %s132 = sphi 0, %s118
    %s136 = sphi 0, %s136
    %s138 = sphi 0, %s136
    %s139 = sphi 0, %s138
    %s153 = sphi 0, %s139
    %s157 = sphi 0, %s157
    %s159 = sphi 0, %s157
    %s160 = sphi 0, %s159
    %s174 = sphi 0, %s160
    %s178 = sphi 0, %s178
    %s180 = sphi 0, %s178
    %s181 = sphi 0, %s180
    %s195 = sphi 0, %s181
    %s199 = sphi 0, %s199
    %s201 = sphi 0, %s199
    %s202 = sphi 0, %s201
    %s216 = sphi 0, %s202
    %s226 = sphi 0, %s228
    %s229 = sphi 0, %s226
    %s230 = sphi 0, %s229
    %s246 = sphi 0, %s230
  $region4: #{tpu_custom_call.1} parent=0 // loop_header_branch
    %17 = sbr.rel (%p15) target = $region8
  $region5: #{tpu_custom_call.1} parent=0 // loop_body
    %s19 = ssub.s32 %s14, 1
    %s20 = ssub.s32 %s14, 2
    %s27 = sadd.s32 1, %s22
    %p28 = scmp.ge.s32.totalorder %s27, 2
    %s29 = scalar_select %p28, 0, %s27
    %s30 = sadd.s32 1, %s21
    %s31 = scalar_select %p28, %s30, %s21
    %p32 = scmp.ge.s32.totalorder %s31, 2
    %s33 = scalar_select %p32, 0, %s31
    %s34 = smul.u32 %s21, 2
    %s35 = sadd.s32 %s34, %s22
    %s36 = smul.u32 %s33, 2
    %s37 = sadd.s32 %s36, %s29
    %s38 = ssub.s32 %s35, %s37
    %p39 = scmp.eq.s32.totalorder %s38, 0
    %s41 = sadd.s32 %s40, 1
    %s42 = scalar_select %p39, %s40, %s41
    %p45 = pneg %p39
    %p46 = scmp.eq.s32.totalorder %s14, 3
    %p47 = por %p45, %p46
    %p48 = scmp.ne.s32.totalorder %s40, %s43
    %p49 = scmp.eq.s32.totalorder %s14, 0
    %p50 = por %p48, %p49
    %p51 = scmp.ne.s32.totalorder %s40, %s43
    %p52 = scmp.eq.s32.totalorder %s19, 3
    %p53 = por %p51, %p52
    %p54 = scmp.ne.s32.totalorder %s43, %s44
    %p55 = scmp.eq.s32.totalorder %s19, 0
    %p56 = por %p54, %p55
    %p57 = scmp.ne.s32.totalorder %s43, %s44
    %p58 = scmp.eq.s32.totalorder %s20, 3
    %p59 = por %p57, %p58
    %p61 = scmp.ne.s32.totalorder %s44, %s60
    %p62 = scmp.eq.s32.totalorder %s20, 0
    %p63 = por %p61, %p62
    %s64 = smul.u32 %s21, 2
    %s65 = sadd.s32 %s64, %s22
    %s66 = smul.u32 %s33, 2
    %s67 = sadd.s32 %s66, %s29
    %s68 = ssub.s32 %s65, %s67
    %p69 = scmp.eq.s32.totalorder %s68, 0
    %s71 = sadd.s32 %s70, 1
    %s72 = scalar_select %p69, %s70, %s71
    %p75 = pneg %p69
    %p76 = scmp.eq.s32.totalorder %s14, 3
    %p77 = por %p75, %p76
    %p78 = scmp.ne.s32.totalorder %s70, %s73
    %p79 = scmp.eq.s32.totalorder %s14, 0
    %p80 = por %p78, %p79
    %p81 = scmp.ne.s32.totalorder %s70, %s73
    %p82 = scmp.eq.s32.totalorder %s19, 3
    %p83 = por %p81, %p82
    %p84 = scmp.ne.s32.totalorder %s73, %s74
    %p85 = scmp.eq.s32.totalorder %s19, 0
    %p86 = por %p84, %p85
    %p87 = scmp.ne.s32.totalorder %s73, %s74
    %p88 = scmp.eq.s32.totalorder %s20, 3
    %p89 = por %p87, %p88
    %p91 = scmp.ne.s32.totalorder %s74, %s90
    %p92 = scmp.eq.s32.totalorder %s20, 0
    %p93 = por %p91, %p92
    %s95 = sadd.s32 %s94, 1
    %p98 = scmp.eq.s32.totalorder %s14, 3
    %p99 = scmp.ne.s32.totalorder %s94, %s96
    %p100 = scmp.eq.s32.totalorder %s14, 0
    %p101 = por %p99, %p100
    %p102 = scmp.ne.s32.totalorder %s94, %s96
    %p103 = scmp.eq.s32.totalorder %s19, 3
    %p104 = por %p102, %p103
    %p105 = scmp.ne.s32.totalorder %s96, %s97
    %p106 = scmp.eq.s32.totalorder %s19, 0
    %p107 = por %p105, %p106
    %p108 = scmp.ne.s32.totalorder %s96, %s97
    %p109 = scmp.eq.s32.totalorder %s20, 3
    %p110 = por %p108, %p109
    %p112 = scmp.ne.s32.totalorder %s97, %s111
    %p113 = scmp.eq.s32.totalorder %s20, 0
    %p114 = por %p112, %p113
    %s116 = sadd.s32 %s115, 1
    %p119 = scmp.eq.s32.totalorder %s14, 3
    %p120 = scmp.ne.s32.totalorder %s115, %s117
    %p121 = scmp.eq.s32.totalorder %s14, 0
    %p122 = por %p120, %p121
    %p123 = scmp.ne.s32.totalorder %s115, %s117
    %p124 = scmp.eq.s32.totalorder %s19, 3
    %p125 = por %p123, %p124
    %p126 = scmp.ne.s32.totalorder %s117, %s118
    %p127 = scmp.eq.s32.totalorder %s19, 0
    %p128 = por %p126, %p127
    %p129 = scmp.ne.s32.totalorder %s117, %s118
    %p130 = scmp.eq.s32.totalorder %s20, 3
    %p131 = por %p129, %p130
    %p133 = scmp.ne.s32.totalorder %s118, %s132
    %p134 = scmp.eq.s32.totalorder %s20, 0
    %p135 = por %p133, %p134
    %s137 = sadd.s32 %s136, 1
    %p140 = scmp.eq.s32.totalorder %s14, 3
    %p141 = scmp.ne.s32.totalorder %s136, %s138
    %p142 = scmp.eq.s32.totalorder %s14, 0
    %p143 = por %p141, %p142
    %p144 = scmp.ne.s32.totalorder %s136, %s138
    %p145 = scmp.eq.s32.totalorder %s19, 3
    %p146 = por %p144, %p145
    %p147 = scmp.ne.s32.totalorder %s138, %s139
    %p148 = scmp.eq.s32.totalorder %s19, 0
    %p149 = por %p147, %p148
    %p150 = scmp.ne.s32.totalorder %s138, %s139
    %p151 = scmp.eq.s32.totalorder %s20, 3
    %p152 = por %p150, %p151
    %p154 = scmp.ne.s32.totalorder %s139, %s153
    %p155 = scmp.eq.s32.totalorder %s20, 0
    %p156 = por %p154, %p155
    %s158 = sadd.s32 %s157, 1
    %p161 = scmp.eq.s32.totalorder %s14, 3
    %p162 = scmp.ne.s32.totalorder %s157, %s159
    %p163 = scmp.eq.s32.totalorder %s14, 0
    %p164 = por %p162, %p163
    %p165 = scmp.ne.s32.totalorder %s157, %s159
    %p166 = scmp.eq.s32.totalorder %s19, 3
    %p167 = por %p165, %p166
    %p168 = scmp.ne.s32.totalorder %s159, %s160
    %p169 = scmp.eq.s32.totalorder %s19, 0
    %p170 = por %p168, %p169
    %p171 = scmp.ne.s32.totalorder %s159, %s160
    %p172 = scmp.eq.s32.totalorder %s20, 3
    %p173 = por %p171, %p172
    %p175 = scmp.ne.s32.totalorder %s160, %s174
    %p176 = scmp.eq.s32.totalorder %s20, 0
    %p177 = por %p175, %p176
    %s179 = sadd.s32 %s178, 1
    %p182 = scmp.eq.s32.totalorder %s14, 3
    %p183 = scmp.ne.s32.totalorder %s178, %s180
    %p184 = scmp.eq.s32.totalorder %s14, 0
    %p185 = por %p183, %p184
    %p186 = scmp.ne.s32.totalorder %s178, %s180
    %p187 = scmp.eq.s32.totalorder %s19, 3
    %p188 = por %p186, %p187
    %p189 = scmp.ne.s32.totalorder %s180, %s181
    %p190 = scmp.eq.s32.totalorder %s19, 0
    %p191 = por %p189, %p190
    %p192 = scmp.ne.s32.totalorder %s180, %s181
    %p193 = scmp.eq.s32.totalorder %s20, 3
    %p194 = por %p192, %p193
    %p196 = scmp.ne.s32.totalorder %s181, %s195
    %p197 = scmp.eq.s32.totalorder %s20, 0
    %p198 = por %p196, %p197
    %s200 = sadd.s32 %s199, 1
    %p203 = scmp.eq.s32.totalorder %s14, 3
    %p204 = scmp.ne.s32.totalorder %s199, %s201
    %p205 = scmp.eq.s32.totalorder %s14, 0
    %p206 = por %p204, %p205
    %p207 = scmp.ne.s32.totalorder %s199, %s201
    %p208 = scmp.eq.s32.totalorder %s19, 3
    %p209 = por %p207, %p208
    %p210 = scmp.ne.s32.totalorder %s201, %s202
    %p211 = scmp.eq.s32.totalorder %s19, 0
    %p212 = por %p210, %p211
    %p213 = scmp.ne.s32.totalorder %s201, %s202
    %p214 = scmp.eq.s32.totalorder %s20, 3
    %p215 = por %p213, %p214
    %p217 = scmp.ne.s32.totalorder %s202, %s216
    %p218 = scmp.eq.s32.totalorder %s20, 0
    %p219 = por %p217, %p218
    %s220 = smul.u32 %s21, 2
    %s221 = sadd.s32 %s220, %s22
    %s222 = smul.u32 %s33, 2
    %s223 = sadd.s32 %s222, %s29
    %s224 = ssub.s32 %s221, %s223
    %p225 = scmp.eq.s32.totalorder %s224, 0
    %s227 = sadd.s32 %s226, 1
    %s228 = scalar_select %p225, %s226, %s227
    %p231 = pneg %p225
    %p232 = scmp.eq.s32.totalorder %s14, 3
    %p233 = por %p231, %p232
    %p234 = scmp.ne.s32.totalorder %s226, %s229
    %p235 = scmp.eq.s32.totalorder %s14, 0
    %p236 = por %p234, %p235
    %p237 = scmp.ne.s32.totalorder %s226, %s229
    %p238 = scmp.eq.s32.totalorder %s19, 3
    %p239 = por %p237, %p238
    %p240 = scmp.ne.s32.totalorder %s229, %s230
    %p241 = scmp.eq.s32.totalorder %s19, 0
    %p242 = por %p240, %p241
    %p243 = scmp.ne.s32.totalorder %s229, %s230
    %p244 = scmp.eq.s32.totalorder %s20, 3
    %p245 = por %p243, %p244
    %p247 = scmp.ne.s32.totalorder %s230, %s246
    %p248 = scmp.eq.s32.totalorder %s20, 0
    %p249 = por %p247, %p248
    %p250 = scmp.le.s32.totalorder 1, %s14
    %p251 = scmp.lt.s32.totalorder %s14, 5
    %p252 = pnand %p250, %p251
    %p253 = pneg %p252
    // Predicated region
    $region9: #{tpu_custom_call.1} parent=5 // pred_check
      _
    $region10: #{tpu_custom_call.1} parent=5 // pred_check_branch
      %255 = sbr.rel (%p252) target = $region12
    $region11: #{tpu_custom_call.1} parent=5 // pred_region
      %s256 = ssub.s32 %s14, 1
      // Predicated region
      $region13: #{tpu_custom_call.1} parent=11 // pred_check
        %p257 = pneg %p107
      $region14: #{tpu_custom_call.1} parent=11 // pred_check_branch
        %259 = sbr.rel (%p257) target = $region16
      $region15: #{tpu_custom_call.1} parent=11 // pred_region
        _
      $region16: #{tpu_custom_call.1} parent=11 // pred_fallthru
        _
      // Predicated region
      $region17: #{tpu_custom_call.1} parent=11 // pred_check
        %p260 = pneg %p128
      $region18: #{tpu_custom_call.1} parent=11 // pred_check_branch
        %262 = sbr.rel (%p260) target = $region20
      $region19: #{tpu_custom_call.1} parent=11 // pred_region
        _
      $region20: #{tpu_custom_call.1} parent=11 // pred_fallthru
        _
      // Predicated region
      $region21: #{tpu_custom_call.1} parent=11 // pred_check
        %p263 = pneg %p149
      $region22: #{tpu_custom_call.1} parent=11 // pred_check_branch
        %265 = sbr.rel (%p263) target = $region24
      $region23: #{tpu_custom_call.1} parent=11 // pred_region
        _
      $region24: #{tpu_custom_call.1} parent=11 // pred_fallthru
        _
      // Predicated region
      $region25: #{tpu_custom_call.1} parent=11 // pred_check
        %p266 = pneg %p170
      $region26: #{tpu_custom_call.1} parent=11 // pred_check_branch
        %268 = sbr.rel (%p266) target = $region28
      $region27: #{tpu_custom_call.1} parent=11 // pred_region
        _
      $region28: #{tpu_custom_call.1} parent=11 // pred_fallthru
        _
      // Predicated region
      $region29: #{tpu_custom_call.1} parent=11 // pred_check
        %p269 = pneg %p191
      $region30: #{tpu_custom_call.1} parent=11 // pred_check_branch
        %271 = sbr.rel (%p269) target = $region32
      $region31: #{tpu_custom_call.1} parent=11 // pred_region
        _
      $region32: #{tpu_custom_call.1} parent=11 // pred_fallthru
        _
      // Predicated region
      $region33: #{tpu_custom_call.1} parent=11 // pred_check
        %p272 = pneg %p212
      $region34: #{tpu_custom_call.1} parent=11 // pred_check_branch
        %274 = sbr.rel (%p272) target = $region36
      $region35: #{tpu_custom_call.1} parent=11 // pred_region
        _
      $region36: #{tpu_custom_call.1} parent=11 // pred_fallthru
        _
    $region12: #{tpu_custom_call.1} parent=5 // pred_fallthru
      _
    %p275 = scmp.lt.s32.totalorder %s14, 4
    // Predicated region
    $region37: #{tpu_custom_call.1} parent=5 // pred_check
      %p276 = pneg %p275
    $region38: #{tpu_custom_call.1} parent=5 // pred_check_branch
      %278 = sbr.rel (%p276) target = $region40
    $region39: #{tpu_custom_call.1} parent=5 // pred_region
      // Predicated region
      $region41: #{tpu_custom_call.1} parent=39 // pred_check
        %p279 = pneg %p50
      $region42: #{tpu_custom_call.1} parent=39 // pred_check_branch
        %281 = sbr.rel (%p279) target = $region44
      $region43: #{tpu_custom_call.1} parent=39 // pred_region
        %s282 = smul.u32 %s21, 2
        %s283 = sadd.s32 %s282, %s22
        %s284 = smul.u32 16, %s283
        %p285 = scmp.lt.s32.totalorder %s284, 63
        %s286 = scalar_select %p285, %s284, 63
        %s287 = smul.addr %s286, 8
        %s288 = scalar_lea.vmem %s0, %s287
        %s289 = smul.u32 %s21, 2
        %s290 = sadd.s32 %s289, %s22
        %s291 = smul.u32 16, %s290
      $region44: #{tpu_custom_call.1} parent=39 // pred_fallthru
        _
      // Predicated region
      $region45: #{tpu_custom_call.1} parent=39 // pred_check
        %p292 = pneg %p80
      $region46: #{tpu_custom_call.1} parent=39 // pred_check_branch
        %294 = sbr.rel (%p292) target = $region48
      $region47: #{tpu_custom_call.1} parent=39 // pred_region
        %s295 = smul.u32 %s21, 2
        %s296 = sadd.s32 %s295, %s22
        %p297 = scmp.lt.s32.totalorder %s296, 3
        %s298 = scalar_select %p297, %s296, 3
        %s299 = smul.addr %s298, 4
        %s300 = smul.addr %s299, 8
        %s301 = scalar_lea.vmem %s1, %s300
        %s302 = smul.u32 %s21, 2
        %s303 = sadd.s32 %s302, %s22
      $region48: #{tpu_custom_call.1} parent=39 // pred_fallthru
        _
    $region40: #{tpu_custom_call.1} parent=5 // pred_fallthru
      _
    %p304 = scmp.le.s32.totalorder 1, %s14
    %p305 = scmp.lt.s32.totalorder %s14, 5
    %p306 = pnand %p304, %p305
    %p307 = pneg %p306
    // Predicated region
    $region49: #{tpu_custom_call.1} parent=5 // pred_check
      _
    $region50: #{tpu_custom_call.1} parent=5 // pred_check_branch
      %309 = sbr.rel (%p306) target = $region52
    $region51: #{tpu_custom_call.1} parent=5 // pred_region
      %s310 = ssub.s32 %s14, 1
      %s311 = smul.u32 %s23, 2
      %s312 = sadd.s32 %s311, %s24
      %s313 = smul.u32 16, %s312
      %p314 = scmp.lt.s32.totalorder %s313, 63
      %s315 = scalar_select %p314, %s313, 63
      %s316 = smul.addr %s315, 8
      %s317 = scalar_lea.vmem %s0, %s316
      %p318 = pneg %p56
      %p319 = pneg %p53
      %s320 = smul.u32 %s23, 2
      %s321 = sadd.s32 %s320, %s24
      %p322 = scmp.lt.s32.totalorder %s321, 3
      %s323 = scalar_select %p322, %s321, 3
      %s324 = smul.addr %s323, 4
      %s325 = smul.addr %s324, 8
      %s326 = scalar_lea.vmem %s1, %s325
      %p327 = pneg %p86
      %p328 = pneg %p83
      %p329 = pneg %p107
      %p330 = pneg %p104
      %p331 = pneg %p128
      %p332 = pneg %p125
      %p333 = pneg %p149
      %p334 = pneg %p146
      %p335 = pneg %p170
      %p336 = pneg %p167
      %p337 = pneg %p191
      %p338 = pneg %p188
      %p339 = pneg %p212
      %p340 = pneg %p209
      %p341 = pneg %p242
      %p342 = pneg %p239
      %s343 = smul.u32 %s23, 2
      %s344 = sadd.s32 %s343, %s24
      %s345 = smul.u32 16, %s344
      %p346 = scmp.lt.s32.totalorder %s345, 63
      %s347 = scalar_select %p346, %s345, 63
      %s348 = smul.addr %s347, 8
      %s349 = scalar_lea.vmem %s8, %s348
      %s350 = smul.u32 %s23, 2
      %s351 = sadd.s32 %s350, %s24
      %s352 = smul.u32 16, %s351
      %p353 = scmp.lt.s32.totalorder %s352, 63
      %s354 = scalar_select %p353, %s352, 63
      %s355 = smul.addr %s354, 8
      %s356 = scalar_lea.vmem %s0, %s355
      %s357 = smul.u32 %s23, 2
      %s358 = sadd.s32 %s357, %s24
      %s359 = smul.u32 16, %s358
      %s360 = smul.u32 %s23, 2
      %s361 = sadd.s32 %s360, %s24
      %p362 = scmp.lt.s32.totalorder %s361, 3
      %s363 = scalar_select %p362, %s361, 3
      %s364 = smul.addr %s363, 4
      %s365 = smul.addr %s364, 8
      %s366 = scalar_lea.vmem %s1, %s365
      %s367 = smul.u32 %s23, 2
      %s368 = sadd.s32 %s367, %s24
      %s369 = smul.u32 %s23, 2
      %s370 = sadd.s32 %s369, %s24
      %s371 = smul.u32 16, %s370
      %p372 = scmp.lt.s32.totalorder %s371, 63
      %s373 = scalar_select %p372, %s371, 63
      %s374 = smul.addr %s373, 8
      %s375 = scalar_lea.vmem %s8, %s374
      %s376 = smul.u32 %s23, 2
      %s377 = sadd.s32 %s376, %s24
      %s378 = smul.u32 16, %s377
      %v379 = vld [vmem:[%s356] sm:$0xff]
      %v380 = vld [vmem:[%s356 + $0x8] sm:$0xff]
      %v381 = vld [vmem:[%s356 + $0x10] sm:$0xff]
      %v382 = vld [vmem:[%s356 + $0x18] sm:$0xff]
      %v383 = vld [vmem:[%s356 + $0x20] sm:$0xff]
      %v384 = vld [vmem:[%s356 + $0x28] sm:$0xff]
      %v385 = vld [vmem:[%s356 + $0x30] sm:$0xff]
      %v386 = vld [vmem:[%s356 + $0x38] sm:$0xff]
      %v387 = vld [vmem:[%s356 + $0x40] sm:$0xff]
      %v388 = vld [vmem:[%s356 + $0x48] sm:$0xff]
      %v389 = vld [vmem:[%s356 + $0x50] sm:$0xff]
      %v390 = vld [vmem:[%s356 + $0x58] sm:$0xff]
      %v391 = vld [vmem:[%s356 + $0x60] sm:$0xff]
      %v392 = vld [vmem:[%s356 + $0x68] sm:$0xff]
      %v393 = vld [vmem:[%s356 + $0x70] sm:$0xff]
      %v394 = vld [vmem:[%s356 + $0x78] sm:$0xff]
      %v395 = vld [vmem:[%s2] sm:$0xff]
      %v396 = vld [vmem:[%s2 + $0x8] sm:$0xff]
      %v397 = vld [vmem:[%s3] sm:$0x1]
      %v399 = vperm.slane %v397, 0
      %vm401 = vcmask 130048
      %v403 = vsel %vm401, %v379, 0
      %v406 = vsel %vm401, %v380, 0
      %v409 = vsel %vm401, %v381, 0
      %v412 = vsel %vm401, %v382, 0
      %v415 = vsel %vm401, %v383, 0
      %v418 = vsel %vm401, %v384, 0
      %v421 = vsel %vm401, %v385, 0
      %v424 = vsel %vm401, %v386, 0
      %v427 = vsel %vm401, %v387, 0
      %v430 = vsel %vm401, %v388, 0
      %v433 = vsel %vm401, %v389, 0
      %v436 = vsel %vm401, %v390, 0
      %v439 = vsel %vm401, %v391, 0
      %v442 = vsel %vm401, %v392, 0
      %v445 = vsel %vm401, %v393, 0
      %v448 = vsel %vm401, %v394, 0
      %450 = vmatpush.msra.mxu0 0.0
      %451 = vmatpush.msra.mxu0 0.0
      %452 = vmatpush.msra.mxu0 0.0
      %453 = vmatpush.msra.mxu0 0.0
      %454 = vmatpush.msra.mxu0 0.0
      %455 = vmatpush.msra.mxu0 0.0
      %456 = vmatpush.msra.mxu0 0.0
      %457 = vmatpush.msra.mxu0 0.0
      %458 = vmatpush.msra.mxu0 0.0
      %459 = vmatpush.msra.mxu0 0.0
      %460 = vmatpush.msra.mxu0 0.0
      %461 = vmatpush.msra.mxu0 0.0
      %462 = vmatpush.msra.mxu0 0.0
      %463 = vmatpush.msra.mxu0 0.0
      %464 = vmatpush.msra.mxu0 %v396
      %465 = vmatpush.msra.mxu0 %v395
      %466 = vmatmul.f32.gmra.mxu0 %v403
      %v467 = vpop.f32.mrf.mxu0
      %v468 = vadd.f32 %v399, %v467
      %469 = vmatmul.f32.gmra.mxu0 %v406
      %v470 = vpop.f32.mrf.mxu0
      %v471 = vadd.f32 %v399, %v470
      %472 = vmatmul.f32.gmra.mxu0 %v409
      %v473 = vpop.f32.mrf.mxu0
      %v474 = vadd.f32 %v399, %v473
      %475 = vmatmul.f32.gmra.mxu0 %v412
      %v476 = vpop.f32.mrf.mxu0
      %v477 = vadd.f32 %v399, %v476
      %478 = vmatmul.f32.gmra.mxu0 %v415
      %v479 = vpop.f32.mrf.mxu0
      %v480 = vadd.f32 %v399, %v479
      %481 = vmatmul.f32.gmra.mxu0 %v418
      %v482 = vpop.f32.mrf.mxu0
      %v483 = vadd.f32 %v399, %v482
      %484 = vmatmul.f32.gmra.mxu0 %v421
      %v485 = vpop.f32.mrf.mxu0
      %v486 = vadd.f32 %v399, %v485
      %487 = vmatmul.f32.gmra.mxu0 %v424
      %v488 = vpop.f32.mrf.mxu0
      %v489 = vadd.f32 %v399, %v488
      %490 = vmatmul.f32.gmra.mxu0 %v427
      %v491 = vpop.f32.mrf.mxu0
      %v492 = vadd.f32 %v399, %v491
      %493 = vmatmul.f32.gmra.mxu0 %v430
      %v494 = vpop.f32.mrf.mxu0
      %v495 = vadd.f32 %v399, %v494
      %496 = vmatmul.f32.gmra.mxu0 %v433
      %v497 = vpop.f32.mrf.mxu0
      %v498 = vadd.f32 %v399, %v497
      %499 = vmatmul.f32.gmra.mxu0 %v436
      %v500 = vpop.f32.mrf.mxu0
      %v501 = vadd.f32 %v399, %v500
      %502 = vmatmul.f32.gmra.mxu0 %v439
      %v503 = vpop.f32.mrf.mxu0
      %v504 = vadd.f32 %v399, %v503
      %505 = vmatmul.f32.gmra.mxu0 %v442
      %v506 = vpop.f32.mrf.mxu0
      %v507 = vadd.f32 %v399, %v506
      %508 = vmatmul.f32.gmra.mxu0 %v445
      %v509 = vpop.f32.mrf.mxu0
      %v510 = vadd.f32 %v399, %v509
      %511 = vmatmul.f32.gmra.mxu0 %v448
      %v512 = vpop.f32.mrf.mxu0
      %v513 = vadd.f32 %v399, %v512
      %514 = vdwg.mxu0
      %v515 = vmax.f32 %v468, 0.0
      %v516 = vmax.f32 %v471, 0.0
      %v517 = vmax.f32 %v474, 0.0
      %v518 = vmax.f32 %v477, 0.0
      %v519 = vmax.f32 %v480, 0.0
      %v520 = vmax.f32 %v483, 0.0
      %v521 = vmax.f32 %v486, 0.0
      %v522 = vmax.f32 %v489, 0.0
      %v523 = vmax.f32 %v492, 0.0
      %v524 = vmax.f32 %v495, 0.0
      %v525 = vmax.f32 %v498, 0.0
      %v526 = vmax.f32 %v501, 0.0
      %v527 = vmax.f32 %v504, 0.0
      %v528 = vmax.f32 %v507, 0.0
      %v529 = vmax.f32 %v510, 0.0
      %v530 = vmax.f32 %v513, 0.0
      %v531 = vld [vmem:[%s366] sm:$0xff]
      %v532 = vld [vmem:[%s366 + $0x8] sm:$0xff]
      %v533 = vld [vmem:[%s366 + $0x10] sm:$0xff]
      %v534 = vld [vmem:[%s366 + $0x18] sm:$0xff]
      %v536 = vsel %vm401, %v531, 0
      %v539 = vsel %vm401, %v532, 0
      %v542 = vsel %vm401, %v533, 0
      %v545 = vsel %vm401, %v534, 0
      %547 = vmatpush.msra.mxu0 0.0
      %548 = vmatpush.msra.mxu0 0.0
      %549 = vmatpush.msra.mxu0 0.0
      %550 = vmatpush.msra.mxu0 0.0
      %551 = vmatpush.msra.mxu0 0.0
      %552 = vmatpush.msra.mxu0 0.0
      %553 = vmatpush.msra.mxu0 0.0
      %554 = vmatpush.msra.mxu0 0.0
      %555 = vmatpush.msra.mxu0 0.0
      %556 = vmatpush.msra.mxu0 0.0
      %557 = vmatpush.msra.mxu0 0.0
      %558 = vmatpush.msra.mxu0 0.0
      %559 = vmatpush.msra.mxu0 0.0
      %560 = vmatpush.msra.mxu0 0.0
      %561 = vmatpush.msra.mxu0 %v396
      %562 = vmatpush.msra.mxu0 %v395
      %563 = vmatmul.f32.gmra.mxu0 %v536
      %v564 = vpop.f32.mrf.mxu0
      %v565 = vadd.f32 %v399, %v564
      %566 = vmatmul.f32.gmra.mxu0 %v539
      %v567 = vpop.f32.mrf.mxu0
      %v568 = vadd.f32 %v399, %v567
      %569 = vmatmul.f32.gmra.mxu0 %v542
      %v570 = vpop.f32.mrf.mxu0
      %v571 = vadd.f32 %v399, %v570
      %572 = vmatmul.f32.gmra.mxu0 %v545
      %v573 = vpop.f32.mrf.mxu0
      %v574 = vadd.f32 %v399, %v573
      %575 = vdwg.mxu0
      %v576 = vmax.f32 %v565, 0.0
      %v577 = vmax.f32 %v568, 0.0
      %v578 = vmax.f32 %v571, 0.0
      %v579 = vmax.f32 %v574, 0.0
      %p580 = scmp.gt.s32.totalorder %s24, 0
      %s581 = scalar_select %p580, 1, 0
      %v582 = vstv %s581
      %vm583 = vcmp.eq.s32.totalorder %v582, 1
      %v584 = vsel %vm583, %v576, 0.0
      %v585 = vsel %vm583, %v577, 0.0
      %p586 = scmp.lt.s32.totalorder %s24, 1
      %s587 = scalar_select %p586, 1, 0
      %v588 = vstv %s587
      %vm589 = vcmp.eq.s32.totalorder %v588, 1
      %v590 = vsel %vm589, %v578, 0.0
      %v591 = vsel %vm589, %v579, 0.0
      %vm592 = vcmask 24576
      %593 = vst.msk [vmem:[#allocation2] sm:$0x1] %vm592, 0.0
      %594 = vst.msk [vmem:[#allocation2 + $0x18] sm:$0x1] %vm592, 0.0
      %595 = vst.msk [vmem:[#allocation2 + $0x30] sm:$0x1] %vm592, 0.0
      %596 = vst.msk [vmem:[#allocation2 + $0x48] sm:$0x1] %vm592, 0.0
      %597 = vst.msk [vmem:[#allocation2 + $0x60] sm:$0x1] %vm592, 0.0
      %598 = vst.msk [vmem:[#allocation2 + $0x78] sm:$0x1] %vm592, 0.0
      %599 = vst.msk [vmem:[#allocation2 + $0x90] sm:$0x1] %vm592, 0.0
      %600 = vst.msk [vmem:[#allocation2 + $0xa8] sm:$0x1] %vm592, 0.0
      %601 = vst.msk [vmem:[#allocation2 + $0xc0] sm:$0x1] %vm592, 0.0
      %602 = vst.msk [vmem:[#allocation2 + $0xd8] sm:$0x1] %vm592, 0.0
      %603 = vst.msk [vmem:[#allocation2 + $0x11] sm:$0x1] %vm592, 0.0
      %604 = vst.msk [vmem:[#allocation2 + $0x29] sm:$0x1] %vm592, 0.0
      %605 = vst.msk [vmem:[#allocation2 + $0x41] sm:$0x1] %vm592, 0.0
      %606 = vst.msk [vmem:[#allocation2 + $0x59] sm:$0x1] %vm592, 0.0
      %607 = vst.msk [vmem:[#allocation2 + $0x71] sm:$0x1] %vm592, 0.0
      %608 = vst.msk [vmem:[#allocation2 + $0x89] sm:$0x1] %vm592, 0.0
      %609 = vst.msk [vmem:[#allocation2 + $0xa1] sm:$0x1] %vm592, 0.0
      %610 = vst.msk [vmem:[#allocation2 + $0xb9] sm:$0x1] %vm592, 0.0
      %611 = vst.msk [vmem:[#allocation2 + $0xd1] sm:$0x1] %vm592, 0.0
      %612 = vst.msk [vmem:[#allocation2 + $0xe9] sm:$0x1] %vm592, 0.0
      %vm613 = vcmask 31744
      %614 = vst.msk [vmem:[#allocation2 + $0x1] sm:$0xff] %vm613, %v584
      %615 = vst.msk [vmem:[#allocation2 + $0x9] sm:$0xff] %vm613, %v585
      %s616 = scalar_lea.vmem [#allocation2], 216
      %617 = vst.msk [vmem:[%s616 + $0x1] sm:$0xff] %vm613, %v590
      %618 = vst.msk [vmem:[%s616 + $0x9] sm:$0xff] %vm613, %v591
      %s619 = scalar_lea.vmem [#allocation2], 24
      %620 = vst.msk [vmem:[%s619 + $0x1] sm:$0xff] %vm613, %v515
      %621 = vst.msk [vmem:[%s619 + $0x9] sm:$0xff] %vm613, %v516
      %622 = vst.msk [vmem:[%s619 + $0x19] sm:$0xff] %vm613, %v517
      %623 = vst.msk [vmem:[%s619 + $0x21] sm:$0xff] %vm613, %v518
      %624 = vst.msk [vmem:[%s619 + $0x31] sm:$0xff] %vm613, %v519
      %625 = vst.msk [vmem:[%s619 + $0x39] sm:$0xff] %vm613, %v520
      %626 = vst.msk [vmem:[%s619 + $0x49] sm:$0xff] %vm613, %v521
      %627 = vst.msk [vmem:[%s619 + $0x51] sm:$0xff] %vm613, %v522
      %628 = vst.msk [vmem:[%s619 + $0x61] sm:$0xff] %vm613, %v523
      %629 = vst.msk [vmem:[%s619 + $0x69] sm:$0xff] %vm613, %v524
      %630 = vst.msk [vmem:[%s619 + $0x79] sm:$0xff] %vm613, %v525
      %631 = vst.msk [vmem:[%s619 + $0x81] sm:$0xff] %vm613, %v526
      %632 = vst.msk [vmem:[%s619 + $0x91] sm:$0xff] %vm613, %v527
      %633 = vst.msk [vmem:[%s619 + $0x99] sm:$0xff] %vm613, %v528
      %634 = vst.msk [vmem:[%s619 + $0xa9] sm:$0xff] %vm613, %v529
      %635 = vst.msk [vmem:[%s619 + $0xb1] sm:$0xff] %vm613, %v530
      %v636 = vld [vmem:[#allocation2] sm:$0xff]
      %v637 = vld [vmem:[#allocation2 + $0x8] sm:$0xff]
      %v638 = vld [vmem:[#allocation2 + $0x18] sm:$0xff]
      %v639 = vld [vmem:[#allocation2 + $0x20] sm:$0xff]
      %v640 = vld [vmem:[#allocation2 + $0x30] sm:$0xff]
      %v641 = vld [vmem:[#allocation2 + $0x38] sm:$0xff]
      %v642 = vld [vmem:[#allocation2 + $0x48] sm:$0xff]
      %v643 = vld [vmem:[#allocation2 + $0x50] sm:$0xff]
      %v644 = vld [vmem:[#allocation2 + $0x60] sm:$0xff]
      %v645 = vld [vmem:[#allocation2 + $0x68] sm:$0xff]
      %v646 = vld [vmem:[#allocation2 + $0x78] sm:$0xff]
      %v647 = vld [vmem:[#allocation2 + $0x80] sm:$0xff]
      %v648 = vld [vmem:[#allocation2 + $0x90] sm:$0xff]
      %v649 = vld [vmem:[#allocation2 + $0x98] sm:$0xff]
      %v650 = vld [vmem:[#allocation2 + $0xa8] sm:$0xff]
      %v651 = vld [vmem:[#allocation2 + $0xb0] sm:$0xff]
      %652 = vst.msk [vmem:[#allocation3] sm:$0xff] %vm613, %v636
      %653 = vst.msk [vmem:[#allocation3 + $0x8] sm:$0xff] %vm613, %v637
      %654 = vst.msk [vmem:[#allocation3 + $0x10] sm:$0xff] %vm613, %v638
      %655 = vst.msk [vmem:[#allocation3 + $0x18] sm:$0xff] %vm613, %v639
      %656 = vst.msk [vmem:[#allocation3 + $0x20] sm:$0xff] %vm613, %v640
      %657 = vst.msk [vmem:[#allocation3 + $0x28] sm:$0xff] %vm613, %v641
      %658 = vst.msk [vmem:[#allocation3 + $0x30] sm:$0xff] %vm613, %v642
      %659 = vst.msk [vmem:[#allocation3 + $0x38] sm:$0xff] %vm613, %v643
      %660 = vst.msk [vmem:[#allocation3 + $0x40] sm:$0xff] %vm613, %v644
      %661 = vst.msk [vmem:[#allocation3 + $0x48] sm:$0xff] %vm613, %v645
      %662 = vst.msk [vmem:[#allocation3 + $0x50] sm:$0xff] %vm613, %v646
      %663 = vst.msk [vmem:[#allocation3 + $0x58] sm:$0xff] %vm613, %v647
      %664 = vst.msk [vmem:[#allocation3 + $0x60] sm:$0xff] %vm613, %v648
      %665 = vst.msk [vmem:[#allocation3 + $0x68] sm:$0xff] %vm613, %v649
      %666 = vst.msk [vmem:[#allocation3 + $0x70] sm:$0xff] %vm613, %v650
      %667 = vst.msk [vmem:[#allocation3 + $0x78] sm:$0xff] %vm613, %v651
      %v668 = vld [vmem:[#allocation2 + $0x1] sm:$0xff]
      %v669 = vld [vmem:[#allocation2 + $0x9] sm:$0xff]
      %v670 = vld [vmem:[#allocation2 + $0x19] sm:$0xff]
      %v671 = vld [vmem:[#allocation2 + $0x21] sm:$0xff]
      %v672 = vld [vmem:[#allocation2 + $0x31] sm:$0xff]
      %v673 = vld [vmem:[#allocation2 + $0x39] sm:$0xff]
      %v674 = vld [vmem:[#allocation2 + $0x49] sm:$0xff]
      %v675 = vld [vmem:[#allocation2 + $0x51] sm:$0xff]
      %v676 = vld [vmem:[#allocation2 + $0x61] sm:$0xff]
      %v677 = vld [vmem:[#allocation2 + $0x69] sm:$0xff]
      %v678 = vld [vmem:[#allocation2 + $0x79] sm:$0xff]
      %v679 = vld [vmem:[#allocation2 + $0x81] sm:$0xff]
      %v680 = vld [vmem:[#allocation2 + $0x91] sm:$0xff]
      %v681 = vld [vmem:[#allocation2 + $0x99] sm:$0xff]
      %v682 = vld [vmem:[#allocation2 + $0xa9] sm:$0xff]
      %v683 = vld [vmem:[#allocation2 + $0xb1] sm:$0xff]
      %700 = vrot.lane.b32.xlu0 %v668, 4
      %v701 = vpop.permute.xlu0 %700
      %702 = vrot.lane.b32.xlu0 %v669, 4
      %v703 = vpop.permute.xlu0 %702
      %704 = vrot.lane.b32.xlu0 %v670, 4
      %v705 = vpop.permute.xlu0 %704
      %706 = vrot.lane.b32.xlu0 %v671, 4
      %v707 = vpop.permute.xlu0 %706
      %708 = vrot.lane.b32.xlu0 %v672, 4
      %v709 = vpop.permute.xlu0 %708
      %710 = vrot.lane.b32.xlu0 %v673, 4
      %v711 = vpop.permute.xlu0 %710
      %712 = vrot.lane.b32.xlu0 %v674, 4
      %v713 = vpop.permute.xlu0 %712
      %714 = vrot.lane.b32.xlu0 %v675, 4
      %v715 = vpop.permute.xlu0 %714
      %716 = vrot.lane.b32.xlu0 %v676, 4
      %v717 = vpop.permute.xlu0 %716
      %718 = vrot.lane.b32.xlu0 %v677, 4
      %v719 = vpop.permute.xlu0 %718
      %720 = vrot.lane.b32.xlu0 %v678, 4
      %v721 = vpop.permute.xlu0 %720
      %722 = vrot.lane.b32.xlu0 %v679, 4
      %v723 = vpop.permute.xlu0 %722
      %724 = vrot.lane.b32.xlu0 %v680, 4
      %v725 = vpop.permute.xlu0 %724
      %726 = vrot.lane.b32.xlu0 %v681, 4
      %v727 = vpop.permute.xlu0 %726
      %728 = vrot.lane.b32.xlu0 %v682, 4
      %v729 = vpop.permute.xlu0 %728
      %730 = vrot.lane.b32.xlu0 %v683, 4
      %v731 = vpop.permute.xlu0 %730
      %vm748 = vcmask 64544
      %749 = vst.msk [vmem:[#allocation3] sm:$0xff] %vm748, %v701
      %750 = vst.msk [vmem:[#allocation3 + $0x8] sm:$0xff] %vm748, %v703
      %751 = vst.msk [vmem:[#allocation3 + $0x10] sm:$0xff] %vm748, %v705
      %752 = vst.msk [vmem:[#allocation3 + $0x18] sm:$0xff] %vm748, %v707
      %753 = vst.msk [vmem:[#allocation3 + $0x20] sm:$0xff] %vm748, %v709
      %754 = vst.msk [vmem:[#allocation3 + $0x28] sm:$0xff] %vm748, %v711
      %755 = vst.msk [vmem:[#allocation3 + $0x30] sm:$0xff] %vm748, %v713
      %756 = vst.msk [vmem:[#allocation3 + $0x38] sm:$0xff] %vm748, %v715
      %757 = vst.msk [vmem:[#allocation3 + $0x40] sm:$0xff] %vm748, %v717
      %758 = vst.msk [vmem:[#allocation3 + $0x48] sm:$0xff] %vm748, %v719
      %759 = vst.msk [vmem:[#allocation3 + $0x50] sm:$0xff] %vm748, %v721
      %760 = vst.msk [vmem:[#allocation3 + $0x58] sm:$0xff] %vm748, %v723
      %761 = vst.msk [vmem:[#allocation3 + $0x60] sm:$0xff] %vm748, %v725
      %762 = vst.msk [vmem:[#allocation3 + $0x68] sm:$0xff] %vm748, %v727
      %763 = vst.msk [vmem:[#allocation3 + $0x70] sm:$0xff] %vm748, %v729
      %764 = vst.msk [vmem:[#allocation3 + $0x78] sm:$0xff] %vm748, %v731
      %v765 = vld [vmem:[#allocation2 + $0x2] sm:$0xff]
      %v766 = vld [vmem:[#allocation2 + $0xa] sm:$0xff]
      %v767 = vld [vmem:[#allocation2 + $0x1a] sm:$0xff]
      %v768 = vld [vmem:[#allocation2 + $0x22] sm:$0xff]
      %v769 = vld [vmem:[#allocation2 + $0x32] sm:$0xff]
      %v770 = vld [vmem:[#allocation2 + $0x3a] sm:$0xff]
      %v771 = vld [vmem:[#allocation2 + $0x4a] sm:$0xff]
      %v772 = vld [vmem:[#allocation2 + $0x52] sm:$0xff]
      %v773 = vld [vmem:[#allocation2 + $0x62] sm:$0xff]
      %v774 = vld [vmem:[#allocation2 + $0x6a] sm:$0xff]
      %v775 = vld [vmem:[#allocation2 + $0x7a] sm:$0xff]
      %v776 = vld [vmem:[#allocation2 + $0x82] sm:$0xff]
      %v777 = vld [vmem:[#allocation2 + $0x92] sm:$0xff]
      %v778 = vld [vmem:[#allocation2 + $0x9a] sm:$0xff]
      %v779 = vld [vmem:[#allocation2 + $0xaa] sm:$0xff]
      %v780 = vld [vmem:[#allocation2 + $0xb2] sm:$0xff]
      %797 = vrot.lane.b32.xlu0 %v765, 8
      %v798 = vpop.permute.xlu0 %797
      %799 = vrot.lane.b32.xlu0 %v766, 8
      %v800 = vpop.permute.xlu0 %799
      %801 = vrot.lane.b32.xlu0 %v767, 8
      %v802 = vpop.permute.xlu0 %801
      %803 = vrot.lane.b32.xlu0 %v768, 8
      %v804 = vpop.permute.xlu0 %803
      %805 = vrot.lane.b32.xlu0 %v769, 8
      %v806 = vpop.permute.xlu0 %805
      %807 = vrot.lane.b32.xlu0 %v770, 8
      %v808 = vpop.permute.xlu0 %807
      %809 = vrot.lane.b32.xlu0 %v771, 8
      %v810 = vpop.permute.xlu0 %809
      %811 = vrot.lane.b32.xlu0 %v772, 8
      %v812 = vpop.permute.xlu0 %811
      %813 = vrot.lane.b32.xlu0 %v773, 8
      %v814 = vpop.permute.xlu0 %813
      %815 = vrot.lane.b32.xlu0 %v774, 8
      %v816 = vpop.permute.xlu0 %815
      %817 = vrot.lane.b32.xlu0 %v775, 8
      %v818 = vpop.permute.xlu0 %817
      %819 = vrot.lane.b32.xlu0 %v776, 8
      %v820 = vpop.permute.xlu0 %819
      %821 = vrot.lane.b32.xlu0 %v777, 8
      %v822 = vpop.permute.xlu0 %821
      %823 = vrot.lane.b32.xlu0 %v778, 8
      %v824 = vpop.permute.xlu0 %823
      %825 = vrot.lane.b32.xlu0 %v779, 8
      %v826 = vpop.permute.xlu0 %825
      %827 = vrot.lane.b32.xlu0 %v780, 8
      %v828 = vpop.permute.xlu0 %827
      %vm845 = vcmask 97344
      %846 = vst.msk [vmem:[#allocation3] sm:$0xff] %vm845, %v798
      %847 = vst.msk [vmem:[#allocation3 + $0x8] sm:$0xff] %vm845, %v800
      %848 = vst.msk [vmem:[#allocation3 + $0x10] sm:$0xff] %vm845, %v802
      %849 = vst.msk [vmem:[#allocation3 + $0x18] sm:$0xff] %vm845, %v804
      %850 = vst.msk [vmem:[#allocation3 + $0x20] sm:$0xff] %vm845, %v806
      %851 = vst.msk [vmem:[#allocation3 + $0x28] sm:$0xff] %vm845, %v808
      %852 = vst.msk [vmem:[#allocation3 + $0x30] sm:$0xff] %vm845, %v810
      %853 = vst.msk [vmem:[#allocation3 + $0x38] sm:$0xff] %vm845, %v812
      %854 = vst.msk [vmem:[#allocation3 + $0x40] sm:$0xff] %vm845, %v814
      %855 = vst.msk [vmem:[#allocation3 + $0x48] sm:$0xff] %vm845, %v816
      %856 = vst.msk [vmem:[#allocation3 + $0x50] sm:$0xff] %vm845, %v818
      %857 = vst.msk [vmem:[#allocation3 + $0x58] sm:$0xff] %vm845, %v820
      %858 = vst.msk [vmem:[#allocation3 + $0x60] sm:$0xff] %vm845, %v822
      %859 = vst.msk [vmem:[#allocation3 + $0x68] sm:$0xff] %vm845, %v824
      %860 = vst.msk [vmem:[#allocation3 + $0x70] sm:$0xff] %vm845, %v826
      %861 = vst.msk [vmem:[#allocation3 + $0x78] sm:$0xff] %vm845, %v828
      %v862 = vld [vmem:[%s619] sm:$0xff]
      %v863 = vld [vmem:[%s619 + $0x8] sm:$0xff]
      %v864 = vld [vmem:[%s619 + $0x18] sm:$0xff]
      %v865 = vld [vmem:[%s619 + $0x20] sm:$0xff]
      %v866 = vld [vmem:[%s619 + $0x30] sm:$0xff]
      %v867 = vld [vmem:[%s619 + $0x38] sm:$0xff]
      %v868 = vld [vmem:[%s619 + $0x48] sm:$0xff]
      %v869 = vld [vmem:[%s619 + $0x50] sm:$0xff]
      %v870 = vld [vmem:[%s619 + $0x60] sm:$0xff]
      %v871 = vld [vmem:[%s619 + $0x68] sm:$0xff]
      %v872 = vld [vmem:[%s619 + $0x78] sm:$0xff]
      %v873 = vld [vmem:[%s619 + $0x80] sm:$0xff]
      %v874 = vld [vmem:[%s619 + $0x90] sm:$0xff]
      %v875 = vld [vmem:[%s619 + $0x98] sm:$0xff]
      %v876 = vld [vmem:[%s619 + $0xa8] sm:$0xff]
      %v877 = vld [vmem:[%s619 + $0xb0] sm:$0xff]
      %894 = vrot.lane.b32.xlu0 %v862, 12
      %v895 = vpop.permute.xlu0 %894
      %896 = vrot.lane.b32.xlu0 %v863, 12
      %v897 = vpop.permute.xlu0 %896
      %898 = vrot.lane.b32.xlu0 %v864, 12
      %v899 = vpop.permute.xlu0 %898
      %900 = vrot.lane.b32.xlu0 %v865, 12
      %v901 = vpop.permute.xlu0 %900
      %902 = vrot.lane.b32.xlu0 %v866, 12
      %v903 = vpop.permute.xlu0 %902
      %904 = vrot.lane.b32.xlu0 %v867, 12
      %v905 = vpop.permute.xlu0 %904
      %906 = vrot.lane.b32.xlu0 %v868, 12
      %v907 = vpop.permute.xlu0 %906
      %908 = vrot.lane.b32.xlu0 %v869, 12
      %v909 = vpop.permute.xlu0 %908
      %910 = vrot.lane.b32.xlu0 %v870, 12
      %v911 = vpop.permute.xlu0 %910
      %912 = vrot.lane.b32.xlu0 %v871, 12
      %v913 = vpop.permute.xlu0 %912
      %914 = vrot.lane.b32.xlu0 %v872, 12
      %v915 = vpop.permute.xlu0 %914
      %916 = vrot.lane.b32.xlu0 %v873, 12
      %v917 = vpop.permute.xlu0 %916
      %918 = vrot.lane.b32.xlu0 %v874, 12
      %v919 = vpop.permute.xlu0 %918
      %920 = vrot.lane.b32.xlu0 %v875, 12
      %v921 = vpop.permute.xlu0 %920
      %922 = vrot.lane.b32.xlu0 %v876, 12
      %v923 = vpop.permute.xlu0 %922
      %924 = vrot.lane.b32.xlu0 %v877, 12
      %v925 = vpop.permute.xlu0 %924
      %vm942 = vcmask 130144
      %943 = vst.msk [vmem:[#allocation3] sm:$0xff] %vm942, %v895
      %944 = vst.msk [vmem:[#allocation3 + $0x8] sm:$0xff] %vm942, %v897
      %945 = vst.msk [vmem:[#allocation3 + $0x10] sm:$0xff] %vm942, %v899
      %946 = vst.msk [vmem:[#allocation3 + $0x18] sm:$0xff] %vm942, %v901
      %947 = vst.msk [vmem:[#allocation3 + $0x20] sm:$0xff] %vm942, %v903
      %948 = vst.msk [vmem:[#allocation3 + $0x28] sm:$0xff] %vm942, %v905
      %949 = vst.msk [vmem:[#allocation3 + $0x30] sm:$0xff] %vm942, %v907
      %950 = vst.msk [vmem:[#allocation3 + $0x38] sm:$0xff] %vm942, %v909
      %951 = vst.msk [vmem:[#allocation3 + $0x40] sm:$0xff] %vm942, %v911
      %952 = vst.msk [vmem:[#allocation3 + $0x48] sm:$0xff] %vm942, %v913
      %953 = vst.msk [vmem:[#allocation3 + $0x50] sm:$0xff] %vm942, %v915
      %954 = vst.msk [vmem:[#allocation3 + $0x58] sm:$0xff] %vm942, %v917
      %955 = vst.msk [vmem:[#allocation3 + $0x60] sm:$0xff] %vm942, %v919
      %956 = vst.msk [vmem:[#allocation3 + $0x68] sm:$0xff] %vm942, %v921
      %957 = vst.msk [vmem:[#allocation3 + $0x70] sm:$0xff] %vm942, %v923
      %958 = vst.msk [vmem:[#allocation3 + $0x78] sm:$0xff] %vm942, %v925
      %v959 = vld [vmem:[%s619 + $0x1] sm:$0xff]
      %v960 = vld [vmem:[%s619 + $0x9] sm:$0xff]
      %v961 = vld [vmem:[%s619 + $0x19] sm:$0xff]
      %v962 = vld [vmem:[%s619 + $0x21] sm:$0xff]
      %v963 = vld [vmem:[%s619 + $0x31] sm:$0xff]
      %v964 = vld [vmem:[%s619 + $0x39] sm:$0xff]
      %v965 = vld [vmem:[%s619 + $0x49] sm:$0xff]
      %v966 = vld [vmem:[%s619 + $0x51] sm:$0xff]
      %v967 = vld [vmem:[%s619 + $0x61] sm:$0xff]
      %v968 = vld [vmem:[%s619 + $0x69] sm:$0xff]
      %v969 = vld [vmem:[%s619 + $0x79] sm:$0xff]
      %v970 = vld [vmem:[%s619 + $0x81] sm:$0xff]
      %v971 = vld [vmem:[%s619 + $0x91] sm:$0xff]
      %v972 = vld [vmem:[%s619 + $0x99] sm:$0xff]
      %v973 = vld [vmem:[%s619 + $0xa9] sm:$0xff]
      %v974 = vld [vmem:[%s619 + $0xb1] sm:$0xff]
      %991 = vrot.lane.b32.xlu0 %v959, 16
      %v992 = vpop.permute.xlu0 %991
      %993 = vrot.lane.b32.xlu0 %v960, 16
      %v994 = vpop.permute.xlu0 %993
      %995 = vrot.lane.b32.xlu0 %v961, 16
      %v996 = vpop.permute.xlu0 %995
      %997 = vrot.lane.b32.xlu0 %v962, 16
      %v998 = vpop.permute.xlu0 %997
      %999 = vrot.lane.b32.xlu0 %v963, 16
      %v1000 = vpop.permute.xlu0 %999
      %1001 = vrot.lane.b32.xlu0 %v964, 16
      %v1002 = vpop.permute.xlu0 %1001
      %1003 = vrot.lane.b32.xlu0 %v965, 16
      %v1004 = vpop.permute.xlu0 %1003
      %1005 = vrot.lane.b32.xlu0 %v966, 16
      %v1006 = vpop.permute.xlu0 %1005
      %1007 = vrot.lane.b32.xlu0 %v967, 16
      %v1008 = vpop.permute.xlu0 %1007
      %1009 = vrot.lane.b32.xlu0 %v968, 16
      %v1010 = vpop.permute.xlu0 %1009
      %1011 = vrot.lane.b32.xlu0 %v969, 16
      %v1012 = vpop.permute.xlu0 %1011
      %1013 = vrot.lane.b32.xlu0 %v970, 16
      %v1014 = vpop.permute.xlu0 %1013
      %1015 = vrot.lane.b32.xlu0 %v971, 16
      %v1016 = vpop.permute.xlu0 %1015
      %1017 = vrot.lane.b32.xlu0 %v972, 16
      %v1018 = vpop.permute.xlu0 %1017
      %1019 = vrot.lane.b32.xlu0 %v973, 16
      %v1020 = vpop.permute.xlu0 %1019
      %1021 = vrot.lane.b32.xlu0 %v974, 16
      %v1022 = vpop.permute.xlu0 %1021
      %vm1039 = vcmask 162944
      %1040 = vst.msk [vmem:[#allocation3] sm:$0xff] %vm1039, %v992
      %1041 = vst.msk [vmem:[#allocation3 + $0x8] sm:$0xff] %vm1039, %v994
      %1042 = vst.msk [vmem:[#allocation3 + $0x10] sm:$0xff] %vm1039, %v996
      %1043 = vst.msk [vmem:[#allocation3 + $0x18] sm:$0xff] %vm1039, %v998
      %1044 = vst.msk [vmem:[#allocation3 + $0x20] sm:$0xff] %vm1039, %v1000
      %1045 = vst.msk [vmem:[#allocation3 + $0x28] sm:$0xff] %vm1039, %v1002
      %1046 = vst.msk [vmem:[#allocation3 + $0x30] sm:$0xff] %vm1039, %v1004
      %1047 = vst.msk [vmem:[#allocation3 + $0x38] sm:$0xff] %vm1039, %v1006
      %1048 = vst.msk [vmem:[#allocation3 + $0x40] sm:$0xff] %vm1039, %v1008
      %1049 = vst.msk [vmem:[#allocation3 + $0x48] sm:$0xff] %vm1039, %v1010
      %1050 = vst.msk [vmem:[#allocation3 + $0x50] sm:$0xff] %vm1039, %v1012
      %1051 = vst.msk [vmem:[#allocation3 + $0x58] sm:$0xff] %vm1039, %v1014
      %1052 = vst.msk [vmem:[#allocation3 + $0x60] sm:$0xff] %vm1039, %v1016
      %1053 = vst.msk [vmem:[#allocation3 + $0x68] sm:$0xff] %vm1039, %v1018
      %1054 = vst.msk [vmem:[#allocation3 + $0x70] sm:$0xff] %vm1039, %v1020
      %1055 = vst.msk [vmem:[#allocation3 + $0x78] sm:$0xff] %vm1039, %v1022
      %v1056 = vld [vmem:[%s619 + $0x2] sm:$0xff]
      %v1057 = vld [vmem:[%s619 + $0xa] sm:$0xff]
      %v1058 = vld [vmem:[%s619 + $0x1a] sm:$0xff]
      %v1059 = vld [vmem:[%s619 + $0x22] sm:$0xff]
      %v1060 = vld [vmem:[%s619 + $0x32] sm:$0xff]
      %v1061 = vld [vmem:[%s619 + $0x3a] sm:$0xff]
      %v1062 = vld [vmem:[%s619 + $0x4a] sm:$0xff]
      %v1063 = vld [vmem:[%s619 + $0x52] sm:$0xff]
      %v1064 = vld [vmem:[%s619 + $0x62] sm:$0xff]
      %v1065 = vld [vmem:[%s619 + $0x6a] sm:$0xff]
      %v1066 = vld [vmem:[%s619 + $0x7a] sm:$0xff]
      %v1067 = vld [vmem:[%s619 + $0x82] sm:$0xff]
      %v1068 = vld [vmem:[%s619 + $0x92] sm:$0xff]
      %v1069 = vld [vmem:[%s619 + $0x9a] sm:$0xff]
      %v1070 = vld [vmem:[%s619 + $0xaa] sm:$0xff]
      %v1071 = vld [vmem:[%s619 + $0xb2] sm:$0xff]
      %1088 = vrot.lane.b32.xlu0 %v1056, 20
      %v1089 = vpop.permute.xlu0 %1088
      %1090 = vrot.lane.b32.xlu0 %v1057, 20
      %v1091 = vpop.permute.xlu0 %1090
      %1092 = vrot.lane.b32.xlu0 %v1058, 20
      %v1093 = vpop.permute.xlu0 %1092
      %1094 = vrot.lane.b32.xlu0 %v1059, 20
      %v1095 = vpop.permute.xlu0 %1094
      %1096 = vrot.lane.b32.xlu0 %v1060, 20
      %v1097 = vpop.permute.xlu0 %1096
      %1098 = vrot.lane.b32.xlu0 %v1061, 20
      %v1099 = vpop.permute.xlu0 %1098
      %1100 = vrot.lane.b32.xlu0 %v1062, 20
      %v1101 = vpop.permute.xlu0 %1100
      %1102 = vrot.lane.b32.xlu0 %v1063, 20
      %v1103 = vpop.permute.xlu0 %1102
      %1104 = vrot.lane.b32.xlu0 %v1064, 20
      %v1105 = vpop.permute.xlu0 %1104
      %1106 = vrot.lane.b32.xlu0 %v1065, 20
      %v1107 = vpop.permute.xlu0 %1106
      %1108 = vrot.lane.b32.xlu0 %v1066, 20
      %v1109 = vpop.permute.xlu0 %1108
      %1110 = vrot.lane.b32.xlu0 %v1067, 20
      %v1111 = vpop.permute.xlu0 %1110
      %1112 = vrot.lane.b32.xlu0 %v1068, 20
      %v1113 = vpop.permute.xlu0 %1112
      %1114 = vrot.lane.b32.xlu0 %v1069, 20
      %v1115 = vpop.permute.xlu0 %1114
      %1116 = vrot.lane.b32.xlu0 %v1070, 20
      %v1117 = vpop.permute.xlu0 %1116
      %1118 = vrot.lane.b32.xlu0 %v1071, 20
      %v1119 = vpop.permute.xlu0 %1118
      %vm1136 = vcmask 195744
      %1137 = vst.msk [vmem:[#allocation3] sm:$0xff] %vm1136, %v1089
      %1138 = vst.msk [vmem:[#allocation3 + $0x8] sm:$0xff] %vm1136, %v1091
      %1139 = vst.msk [vmem:[#allocation3 + $0x10] sm:$0xff] %vm1136, %v1093
      %1140 = vst.msk [vmem:[#allocation3 + $0x18] sm:$0xff] %vm1136, %v1095
      %1141 = vst.msk [vmem:[#allocation3 + $0x20] sm:$0xff] %vm1136, %v1097
      %1142 = vst.msk [vmem:[#allocation3 + $0x28] sm:$0xff] %vm1136, %v1099
      %1143 = vst.msk [vmem:[#allocation3 + $0x30] sm:$0xff] %vm1136, %v1101
      %1144 = vst.msk [vmem:[#allocation3 + $0x38] sm:$0xff] %vm1136, %v1103
      %1145 = vst.msk [vmem:[#allocation3 + $0x40] sm:$0xff] %vm1136, %v1105
      %1146 = vst.msk [vmem:[#allocation3 + $0x48] sm:$0xff] %vm1136, %v1107
      %1147 = vst.msk [vmem:[#allocation3 + $0x50] sm:$0xff] %vm1136, %v1109
      %1148 = vst.msk [vmem:[#allocation3 + $0x58] sm:$0xff] %vm1136, %v1111
      %1149 = vst.msk [vmem:[#allocation3 + $0x60] sm:$0xff] %vm1136, %v1113
      %1150 = vst.msk [vmem:[#allocation3 + $0x68] sm:$0xff] %vm1136, %v1115
      %1151 = vst.msk [vmem:[#allocation3 + $0x70] sm:$0xff] %vm1136, %v1117
      %1152 = vst.msk [vmem:[#allocation3 + $0x78] sm:$0xff] %vm1136, %v1119
      %s1153 = scalar_lea.vmem [#allocation2], 48
      %v1154 = vld [vmem:[%s1153] sm:$0xff]
      %v1155 = vld [vmem:[%s1153 + $0x8] sm:$0xff]
      %v1156 = vld [vmem:[%s1153 + $0x18] sm:$0xff]
      %v1157 = vld [vmem:[%s1153 + $0x20] sm:$0xff]
      %v1158 = vld [vmem:[%s1153 + $0x30] sm:$0xff]
      %v1159 = vld [vmem:[%s1153 + $0x38] sm:$0xff]
      %v1160 = vld [vmem:[%s1153 + $0x48] sm:$0xff]
      %v1161 = vld [vmem:[%s1153 + $0x50] sm:$0xff]
      %v1162 = vld [vmem:[%s1153 + $0x60] sm:$0xff]
      %v1163 = vld [vmem:[%s1153 + $0x68] sm:$0xff]
      %v1164 = vld [vmem:[%s1153 + $0x78] sm:$0xff]
      %v1165 = vld [vmem:[%s1153 + $0x80] sm:$0xff]
      %v1166 = vld [vmem:[%s1153 + $0x90] sm:$0xff]
      %v1167 = vld [vmem:[%s1153 + $0x98] sm:$0xff]
      %v1168 = vld [vmem:[%s1153 + $0xa8] sm:$0xff]
      %v1169 = vld [vmem:[%s1153 + $0xb0] sm:$0xff]
      %1186 = vrot.lane.b32.xlu0 %v1154, 24
      %v1187 = vpop.permute.xlu0 %1186
      %1188 = vrot.lane.b32.xlu0 %v1155, 24
      %v1189 = vpop.permute.xlu0 %1188
      %1190 = vrot.lane.b32.xlu0 %v1156, 24
      %v1191 = vpop.permute.xlu0 %1190
      %1192 = vrot.lane.b32.xlu0 %v1157, 24
      %v1193 = vpop.permute.xlu0 %1192
      %1194 = vrot.lane.b32.xlu0 %v1158, 24
      %v1195 = vpop.permute.xlu0 %1194
      %1196 = vrot.lane.b32.xlu0 %v1159, 24
      %v1197 = vpop.permute.xlu0 %1196
      %1198 = vrot.lane.b32.xlu0 %v1160, 24
      %v1199 = vpop.permute.xlu0 %1198
      %1200 = vrot.lane.b32.xlu0 %v1161, 24
      %v1201 = vpop.permute.xlu0 %1200
      %1202 = vrot.lane.b32.xlu0 %v1162, 24
      %v1203 = vpop.permute.xlu0 %1202
      %1204 = vrot.lane.b32.xlu0 %v1163, 24
      %v1205 = vpop.permute.xlu0 %1204
      %1206 = vrot.lane.b32.xlu0 %v1164, 24
      %v1207 = vpop.permute.xlu0 %1206
      %1208 = vrot.lane.b32.xlu0 %v1165, 24
      %v1209 = vpop.permute.xlu0 %1208
      %1210 = vrot.lane.b32.xlu0 %v1166, 24
      %v1211 = vpop.permute.xlu0 %1210
      %1212 = vrot.lane.b32.xlu0 %v1167, 24
      %v1213 = vpop.permute.xlu0 %1212
      %1214 = vrot.lane.b32.xlu0 %v1168, 24
      %v1215 = vpop.permute.xlu0 %1214
      %1216 = vrot.lane.b32.xlu0 %v1169, 24
      %v1217 = vpop.permute.xlu0 %1216
      %vm1234 = vcmask 228544
      %1235 = vst.msk [vmem:[#allocation3] sm:$0xff] %vm1234, %v1187
      %1236 = vst.msk [vmem:[#allocation3 + $0x8] sm:$0xff] %vm1234, %v1189
      %1237 = vst.msk [vmem:[#allocation3 + $0x10] sm:$0xff] %vm1234, %v1191
      %1238 = vst.msk [vmem:[#allocation3 + $0x18] sm:$0xff] %vm1234, %v1193
      %1239 = vst.msk [vmem:[#allocation3 + $0x20] sm:$0xff] %vm1234, %v1195
      %1240 = vst.msk [vmem:[#allocation3 + $0x28] sm:$0xff] %vm1234, %v1197
      %1241 = vst.msk [vmem:[#allocation3 + $0x30] sm:$0xff] %vm1234, %v1199
      %1242 = vst.msk [vmem:[#allocation3 + $0x38] sm:$0xff] %vm1234, %v1201
      %1243 = vst.msk [vmem:[#allocation3 + $0x40] sm:$0xff] %vm1234, %v1203
      %1244 = vst.msk [vmem:[#allocation3 + $0x48] sm:$0xff] %vm1234, %v1205
      %1245 = vst.msk [vmem:[#allocation3 + $0x50] sm:$0xff] %vm1234, %v1207
      %1246 = vst.msk [vmem:[#allocation3 + $0x58] sm:$0xff] %vm1234, %v1209
      %1247 = vst.msk [vmem:[#allocation3 + $0x60] sm:$0xff] %vm1234, %v1211
      %1248 = vst.msk [vmem:[#allocation3 + $0x68] sm:$0xff] %vm1234, %v1213
      %1249 = vst.msk [vmem:[#allocation3 + $0x70] sm:$0xff] %vm1234, %v1215
      %1250 = vst.msk [vmem:[#allocation3 + $0x78] sm:$0xff] %vm1234, %v1217
      %v1251 = vld [vmem:[%s1153 + $0x1] sm:$0xff]
      %v1252 = vld [vmem:[%s1153 + $0x9] sm:$0xff]
      %v1253 = vld [vmem:[%s1153 + $0x19] sm:$0xff]
      %v1254 = vld [vmem:[%s1153 + $0x21] sm:$0xff]
      %v1255 = vld [vmem:[%s1153 + $0x31] sm:$0xff]
      %v1256 = vld [vmem:[%s1153 + $0x39] sm:$0xff]
      %v1257 = vld [vmem:[%s1153 + $0x49] sm:$0xff]
      %v1258 = vld [vmem:[%s1153 + $0x51] sm:$0xff]
      %v1259 = vld [vmem:[%s1153 + $0x61] sm:$0xff]
      %v1260 = vld [vmem:[%s1153 + $0x69] sm:$0xff]
      %v1261 = vld [vmem:[%s1153 + $0x79] sm:$0xff]
      %v1262 = vld [vmem:[%s1153 + $0x81] sm:$0xff]
      %v1263 = vld [vmem:[%s1153 + $0x91] sm:$0xff]
      %v1264 = vld [vmem:[%s1153 + $0x99] sm:$0xff]
      %v1265 = vld [vmem:[%s1153 + $0xa9] sm:$0xff]
      %v1266 = vld [vmem:[%s1153 + $0xb1] sm:$0xff]
      %1283 = vrot.lane.b32.xlu0 %v1251, 28
      %v1284 = vpop.permute.xlu0 %1283
      %1285 = vrot.lane.b32.xlu0 %v1252, 28
      %v1286 = vpop.permute.xlu0 %1285
      %1287 = vrot.lane.b32.xlu0 %v1253, 28
      %v1288 = vpop.permute.xlu0 %1287
      %1289 = vrot.lane.b32.xlu0 %v1254, 28
      %v1290 = vpop.permute.xlu0 %1289
      %1291 = vrot.lane.b32.xlu0 %v1255, 28
      %v1292 = vpop.permute.xlu0 %1291
      %1293 = vrot.lane.b32.xlu0 %v1256, 28
      %v1294 = vpop.permute.xlu0 %1293
      %1295 = vrot.lane.b32.xlu0 %v1257, 28
      %v1296 = vpop.permute.xlu0 %1295
      %1297 = vrot.lane.b32.xlu0 %v1258, 28
      %v1298 = vpop.permute.xlu0 %1297
      %1299 = vrot.lane.b32.xlu0 %v1259, 28
      %v1300 = vpop.permute.xlu0 %1299
      %1301 = vrot.lane.b32.xlu0 %v1260, 28
      %v1302 = vpop.permute.xlu0 %1301
      %1303 = vrot.lane.b32.xlu0 %v1261, 28
      %v1304 = vpop.permute.xlu0 %1303
      %1305 = vrot.lane.b32.xlu0 %v1262, 28
      %v1306 = vpop.permute.xlu0 %1305
      %1307 = vrot.lane.b32.xlu0 %v1263, 28
      %v1308 = vpop.permute.xlu0 %1307
      %1309 = vrot.lane.b32.xlu0 %v1264, 28
      %v1310 = vpop.permute.xlu0 %1309
      %1311 = vrot.lane.b32.xlu0 %v1265, 28
      %v1312 = vpop.permute.xlu0 %1311
      %1313 = vrot.lane.b32.xlu0 %v1266, 28
      %v1314 = vpop.permute.xlu0 %1313
      %vm1331 = vcmask 261344
      %1332 = vst.msk [vmem:[#allocation3] sm:$0xff] %vm1331, %v1284
      %1333 = vst.msk [vmem:[#allocation3 + $0x8] sm:$0xff] %vm1331, %v1286
      %1334 = vst.msk [vmem:[#allocation3 + $0x10] sm:$0xff] %vm1331, %v1288
      %1335 = vst.msk [vmem:[#allocation3 + $0x18] sm:$0xff] %vm1331, %v1290
      %1336 = vst.msk [vmem:[#allocation3 + $0x20] sm:$0xff] %vm1331, %v1292
      %1337 = vst.msk [vmem:[#allocation3 + $0x28] sm:$0xff] %vm1331, %v1294
      %1338 = vst.msk [vmem:[#allocation3 + $0x30] sm:$0xff] %vm1331, %v1296
      %1339 = vst.msk [vmem:[#allocation3 + $0x38] sm:$0xff] %vm1331, %v1298
      %1340 = vst.msk [vmem:[#allocation3 + $0x40] sm:$0xff] %vm1331, %v1300
      %1341 = vst.msk [vmem:[#allocation3 + $0x48] sm:$0xff] %vm1331, %v1302
      %1342 = vst.msk [vmem:[#allocation3 + $0x50] sm:$0xff] %vm1331, %v1304
      %1343 = vst.msk [vmem:[#allocation3 + $0x58] sm:$0xff] %vm1331, %v1306
      %1344 = vst.msk [vmem:[#allocation3 + $0x60] sm:$0xff] %vm1331, %v1308
      %1345 = vst.msk [vmem:[#allocation3 + $0x68] sm:$0xff] %vm1331, %v1310
      %1346 = vst.msk [vmem:[#allocation3 + $0x70] sm:$0xff] %vm1331, %v1312
      %1347 = vst.msk [vmem:[#allocation3 + $0x78] sm:$0xff] %vm1331, %v1314
      %v1348 = vld [vmem:[%s1153 + $0x2] sm:$0xff]
      %v1349 = vld [vmem:[%s1153 + $0xa] sm:$0xff]
      %v1350 = vld [vmem:[%s1153 + $0x1a] sm:$0xff]
      %v1351 = vld [vmem:[%s1153 + $0x22] sm:$0xff]
      %v1352 = vld [vmem:[%s1153 + $0x32] sm:$0xff]
      %v1353 = vld [vmem:[%s1153 + $0x3a] sm:$0xff]
      %v1354 = vld [vmem:[%s1153 + $0x4a] sm:$0xff]
      %v1355 = vld [vmem:[%s1153 + $0x52] sm:$0xff]
      %v1356 = vld [vmem:[%s1153 + $0x62] sm:$0xff]
      %v1357 = vld [vmem:[%s1153 + $0x6a] sm:$0xff]
      %v1358 = vld [vmem:[%s1153 + $0x7a] sm:$0xff]
      %v1359 = vld [vmem:[%s1153 + $0x82] sm:$0xff]
      %v1360 = vld [vmem:[%s1153 + $0x92] sm:$0xff]
      %v1361 = vld [vmem:[%s1153 + $0x9a] sm:$0xff]
      %v1362 = vld [vmem:[%s1153 + $0xaa] sm:$0xff]
      %v1363 = vld [vmem:[%s1153 + $0xb2] sm:$0xff]
      %1380 = vrot.lane.b32.xlu0 %v1348, 32
      %v1381 = vpop.permute.xlu0 %1380
      %1382 = vrot.lane.b32.xlu0 %v1349, 32
      %v1383 = vpop.permute.xlu0 %1382
      %1384 = vrot.lane.b32.xlu0 %v1350, 32
      %v1385 = vpop.permute.xlu0 %1384
      %1386 = vrot.lane.b32.xlu0 %v1351, 32
      %v1387 = vpop.permute.xlu0 %1386
      %1388 = vrot.lane.b32.xlu0 %v1352, 32
      %v1389 = vpop.permute.xlu0 %1388
      %1390 = vrot.lane.b32.xlu0 %v1353, 32
      %v1391 = vpop.permute.xlu0 %1390
      %1392 = vrot.lane.b32.xlu0 %v1354, 32
      %v1393 = vpop.permute.xlu0 %1392
      %1394 = vrot.lane.b32.xlu0 %v1355, 32
      %v1395 = vpop.permute.xlu0 %1394
      %1396 = vrot.lane.b32.xlu0 %v1356, 32
      %v1397 = vpop.permute.xlu0 %1396
      %1398 = vrot.lane.b32.xlu0 %v1357, 32
      %v1399 = vpop.permute.xlu0 %1398
      %1400 = vrot.lane.b32.xlu0 %v1358, 32
      %v1401 = vpop.permute.xlu0 %1400
      %1402 = vrot.lane.b32.xlu0 %v1359, 32
      %v1403 = vpop.permute.xlu0 %1402
      %1404 = vrot.lane.b32.xlu0 %v1360, 32
      %v1405 = vpop.permute.xlu0 %1404
      %1406 = vrot.lane.b32.xlu0 %v1361, 32
      %v1407 = vpop.permute.xlu0 %1406
      %1408 = vrot.lane.b32.xlu0 %v1362, 32
      %v1409 = vpop.permute.xlu0 %1408
      %1410 = vrot.lane.b32.xlu0 %v1363, 32
      %v1411 = vpop.permute.xlu0 %1410
      %vm1428 = vcmask 294144
      %1429 = vst.msk [vmem:[#allocation3] sm:$0xff] %vm1428, %v1381
      %1430 = vst.msk [vmem:[#allocation3 + $0x8] sm:$0xff] %vm1428, %v1383
      %1431 = vst.msk [vmem:[#allocation3 + $0x10] sm:$0xff] %vm1428, %v1385
      %1432 = vst.msk [vmem:[#allocation3 + $0x18] sm:$0xff] %vm1428, %v1387
      %1433 = vst.msk [vmem:[#allocation3 + $0x20] sm:$0xff] %vm1428, %v1389
      %1434 = vst.msk [vmem:[#allocation3 + $0x28] sm:$0xff] %vm1428, %v1391
      %1435 = vst.msk [vmem:[#allocation3 + $0x30] sm:$0xff] %vm1428, %v1393
      %1436 = vst.msk [vmem:[#allocation3 + $0x38] sm:$0xff] %vm1428, %v1395
      %1437 = vst.msk [vmem:[#allocation3 + $0x40] sm:$0xff] %vm1428, %v1397
      %1438 = vst.msk [vmem:[#allocation3 + $0x48] sm:$0xff] %vm1428, %v1399
      %1439 = vst.msk [vmem:[#allocation3 + $0x50] sm:$0xff] %vm1428, %v1401
      %1440 = vst.msk [vmem:[#allocation3 + $0x58] sm:$0xff] %vm1428, %v1403
      %1441 = vst.msk [vmem:[#allocation3 + $0x60] sm:$0xff] %vm1428, %v1405
      %1442 = vst.msk [vmem:[#allocation3 + $0x68] sm:$0xff] %vm1428, %v1407
      %1443 = vst.msk [vmem:[#allocation3 + $0x70] sm:$0xff] %vm1428, %v1409
      %1444 = vst.msk [vmem:[#allocation3 + $0x78] sm:$0xff] %vm1428, %v1411
      %v1445 = vld [vmem:[#allocation3] sm:$0xff]
      %v1446 = vld [vmem:[#allocation3 + $0x8] sm:$0xff]
      %v1447 = vld [vmem:[#allocation3 + $0x10] sm:$0xff]
      %v1448 = vld [vmem:[#allocation3 + $0x18] sm:$0xff]
      %v1449 = vld [vmem:[#allocation3 + $0x20] sm:$0xff]
      %v1450 = vld [vmem:[#allocation3 + $0x28] sm:$0xff]
      %v1451 = vld [vmem:[#allocation3 + $0x30] sm:$0xff]
      %v1452 = vld [vmem:[#allocation3 + $0x38] sm:$0xff]
      %v1453 = vld [vmem:[#allocation3 + $0x40] sm:$0xff]
      %v1454 = vld [vmem:[#allocation3 + $0x48] sm:$0xff]
      %v1455 = vld [vmem:[#allocation3 + $0x50] sm:$0xff]
      %v1456 = vld [vmem:[#allocation3 + $0x58] sm:$0xff]
      %v1457 = vld [vmem:[#allocation3 + $0x60] sm:$0xff]
      %v1458 = vld [vmem:[#allocation3 + $0x68] sm:$0xff]
      %v1459 = vld [vmem:[#allocation3 + $0x70] sm:$0xff]
      %v1460 = vld [vmem:[#allocation3 + $0x78] sm:$0xff]
      %v1461 = vld [vmem:[%s4] sm:$0xff]
      %v1462 = vld [vmem:[%s4 + $0x8] sm:$0xff]
      %v1463 = vld [vmem:[%s4 + $0x10] sm:$0xff]
      %v1464 = vld [vmem:[%s4 + $0x18] sm:$0xff]
      %v1465 = vld [vmem:[%s4 + $0x20] sm:$0xf]
      %v1466 = vld [vmem:[%s5] sm:$0x1]
      %v1468 = vperm.slane %v1466, 0
      %vm1470 = vcmask 293888
      %v1472 = vsel %vm1470, %v1445, 0
      %v1475 = vsel %vm1470, %v1446, 0
      %v1478 = vsel %vm1470, %v1447, 0
      %v1481 = vsel %vm1470, %v1448, 0
      %v1484 = vsel %vm1470, %v1449, 0
      %v1487 = vsel %vm1470, %v1450, 0
      %v1490 = vsel %vm1470, %v1451, 0
      %v1493 = vsel %vm1470, %v1452, 0
      %v1496 = vsel %vm1470, %v1453, 0
      %v1499 = vsel %vm1470, %v1454, 0
      %v1502 = vsel %vm1470, %v1455, 0
      %v1505 = vsel %vm1470, %v1456, 0
      %v1508 = vsel %vm1470, %v1457, 0
      %v1511 = vsel %vm1470, %v1458, 0
      %v1514 = vsel %vm1470, %v1459, 0
      %v1517 = vsel %vm1470, %v1460, 0
      %vm1519 = vcmask 1043456
      %v1521 = vsel %vm1519, %v1465, 0
      %1523 = vmatpush.msra.mxu0 0.0
      %1524 = vmatpush.msra.mxu0 0.0
      %1525 = vmatpush.msra.mxu0 0.0
      %1526 = vmatpush.msra.mxu0 0.0
      %1527 = vmatpush.msra.mxu0 0.0
      %1528 = vmatpush.msra.mxu0 0.0
      %1529 = vmatpush.msra.mxu0 0.0
      %1530 = vmatpush.msra.mxu0 0.0
      %1531 = vmatpush.msra.mxu0 0.0
      %1532 = vmatpush.msra.mxu0 0.0
      %1533 = vmatpush.msra.mxu0 0.0
      %1534 = vmatpush.msra.mxu0 %v1521
      %1535 = vmatpush.msra.mxu0 %v1464
      %1536 = vmatpush.msra.mxu0 %v1463
      %1537 = vmatpush.msra.mxu0 %v1462
      %1538 = vmatpush.msra.mxu0 %v1461
      %1539 = vmatmul.f32.gmra.mxu0 %v1472
      %v1540 = vpop.f32.mrf.mxu0
      %v1541 = vadd.f32 %v1468, %v1540
      %1542 = vmatmul.f32.gmra.mxu0 %v1475
      %v1543 = vpop.f32.mrf.mxu0
      %v1544 = vadd.f32 %v1468, %v1543
      %1545 = vmatmul.f32.gmra.mxu0 %v1478
      %v1546 = vpop.f32.mrf.mxu0
      %v1547 = vadd.f32 %v1468, %v1546
      %1548 = vmatmul.f32.gmra.mxu0 %v1481
      %v1549 = vpop.f32.mrf.mxu0
      %v1550 = vadd.f32 %v1468, %v1549
      %1551 = vmatmul.f32.gmra.mxu0 %v1484
      %v1552 = vpop.f32.mrf.mxu0
      %v1553 = vadd.f32 %v1468, %v1552
      %1554 = vmatmul.f32.gmra.mxu0 %v1487
      %v1555 = vpop.f32.mrf.mxu0
      %v1556 = vadd.f32 %v1468, %v1555
      %1557 = vmatmul.f32.gmra.mxu0 %v1490
      %v1558 = vpop.f32.mrf.mxu0
      %v1559 = vadd.f32 %v1468, %v1558
      %1560 = vmatmul.f32.gmra.mxu0 %v1493
      %v1561 = vpop.f32.mrf.mxu0
      %v1562 = vadd.f32 %v1468, %v1561
      %1563 = vmatmul.f32.gmra.mxu0 %v1496
      %v1564 = vpop.f32.mrf.mxu0
      %v1565 = vadd.f32 %v1468, %v1564
      %1566 = vmatmul.f32.gmra.mxu0 %v1499
      %v1567 = vpop.f32.mrf.mxu0
      %v1568 = vadd.f32 %v1468, %v1567
      %1569 = vmatmul.f32.gmra.mxu0 %v1502
      %v1570 = vpop.f32.mrf.mxu0
      %v1571 = vadd.f32 %v1468, %v1570
      %1572 = vmatmul.f32.gmra.mxu0 %v1505
      %v1573 = vpop.f32.mrf.mxu0
      %v1574 = vadd.f32 %v1468, %v1573
      %1575 = vmatmul.f32.gmra.mxu0 %v1508
      %v1576 = vpop.f32.mrf.mxu0
      %v1577 = vadd.f32 %v1468, %v1576
      %1578 = vmatmul.f32.gmra.mxu0 %v1511
      %v1579 = vpop.f32.mrf.mxu0
      %v1580 = vadd.f32 %v1468, %v1579
      %1581 = vmatmul.f32.gmra.mxu0 %v1514
      %v1582 = vpop.f32.mrf.mxu0
      %v1583 = vadd.f32 %v1468, %v1582
      %1584 = vmatmul.f32.gmra.mxu0 %v1517
      %v1585 = vpop.f32.mrf.mxu0
      %v1586 = vadd.f32 %v1468, %v1585
      %1587 = vdwg.mxu0
      %v1588 = vmax.f32 %v1541, 0.0
      %v1589 = vmax.f32 %v1544, 0.0
      %v1590 = vmax.f32 %v1547, 0.0
      %v1591 = vmax.f32 %v1550, 0.0
      %v1592 = vmax.f32 %v1553, 0.0
      %v1593 = vmax.f32 %v1556, 0.0
      %v1594 = vmax.f32 %v1559, 0.0
      %v1595 = vmax.f32 %v1562, 0.0
      %v1596 = vmax.f32 %v1565, 0.0
      %v1597 = vmax.f32 %v1568, 0.0
      %v1598 = vmax.f32 %v1571, 0.0
      %v1599 = vmax.f32 %v1574, 0.0
      %v1600 = vmax.f32 %v1577, 0.0
      %v1601 = vmax.f32 %v1580, 0.0
      %v1602 = vmax.f32 %v1583, 0.0
      %v1603 = vmax.f32 %v1586, 0.0
      %v1604 = vld [vmem:[%s6] sm:$0xf]
      %v1605 = vld [vmem:[%s7] sm:$0x1]
      %v1607 = vperm.slane %v1605, 0
      %v1610 = vsel %vm613, %v1588, 0
      %v1613 = vsel %vm613, %v1589, 0
      %v1616 = vsel %vm613, %v1590, 0
      %v1619 = vsel %vm613, %v1591, 0
      %v1622 = vsel %vm613, %v1592, 0
      %v1625 = vsel %vm613, %v1593, 0
      %v1628 = vsel %vm613, %v1594, 0
      %v1631 = vsel %vm613, %v1595, 0
      %v1634 = vsel %vm613, %v1596, 0
      %v1637 = vsel %vm613, %v1597, 0
      %v1640 = vsel %vm613, %v1598, 0
      %v1643 = vsel %vm613, %v1599, 0
      %v1646 = vsel %vm613, %v1600, 0
      %v1649 = vsel %vm613, %v1601, 0
      %v1652 = vsel %vm613, %v1602, 0
      %v1655 = vsel %vm613, %v1603, 0
      %v1658 = vsel %vm1519, %v1604, 0
      %1660 = vmatpush.msra.mxu0 0.0
      %1661 = vmatpush.msra.mxu0 0.0
      %1662 = vmatpush.msra.mxu0 0.0
      %1663 = vmatpush.msra.mxu0 0.0
      %1664 = vmatpush.msra.mxu0 0.0
      %1665 = vmatpush.msra.mxu0 0.0
      %1666 = vmatpush.msra.mxu0 0.0
      %1667 = vmatpush.msra.mxu0 0.0
      %1668 = vmatpush.msra.mxu0 0.0
      %1669 = vmatpush.msra.mxu0 0.0
      %1670 = vmatpush.msra.mxu0 0.0
      %1671 = vmatpush.msra.mxu0 0.0
      %1672 = vmatpush.msra.mxu0 0.0
      %1673 = vmatpush.msra.mxu0 0.0
      %1674 = vmatpush.msra.mxu0 0.0
      %1675 = vmatpush.msra.mxu0 %v1658
      %1676 = vmatmul.f32.gmra.mxu0 %v1610
      %v1677 = vpop.f32.mrf.mxu0
      %v1678 = vadd.f32 %v1607, %v1677
      %1679 = vmatmul.f32.gmra.mxu0 %v1613
      %v1680 = vpop.f32.mrf.mxu0
      %v1681 = vadd.f32 %v1607, %v1680
      %1682 = vmatmul.f32.gmra.mxu0 %v1616
      %v1683 = vpop.f32.mrf.mxu0
      %v1684 = vadd.f32 %v1607, %v1683
      %1685 = vmatmul.f32.gmra.mxu0 %v1619
      %v1686 = vpop.f32.mrf.mxu0
      %v1687 = vadd.f32 %v1607, %v1686
      %1688 = vmatmul.f32.gmra.mxu0 %v1622
      %v1689 = vpop.f32.mrf.mxu0
      %v1690 = vadd.f32 %v1607, %v1689
      %1691 = vmatmul.f32.gmra.mxu0 %v1625
      %v1692 = vpop.f32.mrf.mxu0
      %v1693 = vadd.f32 %v1607, %v1692
      %1694 = vmatmul.f32.gmra.mxu0 %v1628
      %v1695 = vpop.f32.mrf.mxu0
      %v1696 = vadd.f32 %v1607, %v1695
      %1697 = vmatmul.f32.gmra.mxu0 %v1631
      %v1698 = vpop.f32.mrf.mxu0
      %v1699 = vadd.f32 %v1607, %v1698
      %1700 = vmatmul.f32.gmra.mxu0 %v1634
      %v1701 = vpop.f32.mrf.mxu0
      %v1702 = vadd.f32 %v1607, %v1701
      %1703 = vmatmul.f32.gmra.mxu0 %v1637
      %v1704 = vpop.f32.mrf.mxu0
      %v1705 = vadd.f32 %v1607, %v1704
      %1706 = vmatmul.f32.gmra.mxu0 %v1640
      %v1707 = vpop.f32.mrf.mxu0
      %v1708 = vadd.f32 %v1607, %v1707
      %1709 = vmatmul.f32.gmra.mxu0 %v1643
      %v1710 = vpop.f32.mrf.mxu0
      %v1711 = vadd.f32 %v1607, %v1710
      %1712 = vmatmul.f32.gmra.mxu0 %v1646
      %v1713 = vpop.f32.mrf.mxu0
      %v1714 = vadd.f32 %v1607, %v1713
      %1715 = vmatmul.f32.gmra.mxu0 %v1649
      %v1716 = vpop.f32.mrf.mxu0
      %v1717 = vadd.f32 %v1607, %v1716
      %1718 = vmatmul.f32.gmra.mxu0 %v1652
      %v1719 = vpop.f32.mrf.mxu0
      %v1720 = vadd.f32 %v1607, %v1719
      %1721 = vmatmul.f32.gmra.mxu0 %v1655
      %v1722 = vpop.f32.mrf.mxu0
      %v1723 = vadd.f32 %v1607, %v1722
      %1724 = vdwg.mxu0
      %v1725 = vmax.f32 %v1678, 0.0
      %v1726 = vmax.f32 %v1681, 0.0
      %v1727 = vmax.f32 %v1684, 0.0
      %v1728 = vmax.f32 %v1687, 0.0
      %v1729 = vmax.f32 %v1690, 0.0
      %v1730 = vmax.f32 %v1693, 0.0
      %v1731 = vmax.f32 %v1696, 0.0
      %v1732 = vmax.f32 %v1699, 0.0
      %v1733 = vmax.f32 %v1702, 0.0
      %v1734 = vmax.f32 %v1705, 0.0
      %v1735 = vmax.f32 %v1708, 0.0
      %v1736 = vmax.f32 %v1711, 0.0
      %v1737 = vmax.f32 %v1714, 0.0
      %v1738 = vmax.f32 %v1717, 0.0
      %v1739 = vmax.f32 %v1720, 0.0
      %v1740 = vmax.f32 %v1723, 0.0
      %v1741 = vadd.f32 %v379, %v1725
      %v1742 = vadd.f32 %v380, %v1726
      %v1743 = vadd.f32 %v381, %v1727
      %v1744 = vadd.f32 %v382, %v1728
      %v1745 = vadd.f32 %v383, %v1729
      %v1746 = vadd.f32 %v384, %v1730
      %v1747 = vadd.f32 %v385, %v1731
      %v1748 = vadd.f32 %v386, %v1732
      %v1749 = vadd.f32 %v387, %v1733
      %v1750 = vadd.f32 %v388, %v1734
      %v1751 = vadd.f32 %v389, %v1735
      %v1752 = vadd.f32 %v390, %v1736
      %v1753 = vadd.f32 %v391, %v1737
      %v1754 = vadd.f32 %v392, %v1738
      %v1755 = vadd.f32 %v393, %v1739
      %v1756 = vadd.f32 %v394, %v1740
      %v1757 = vmax.f32 %v1741, 0.0
      %v1758 = vmax.f32 %v1742, 0.0
      %v1759 = vmax.f32 %v1743, 0.0
      %v1760 = vmax.f32 %v1744, 0.0
      %v1761 = vmax.f32 %v1745, 0.0
      %v1762 = vmax.f32 %v1746, 0.0
      %v1763 = vmax.f32 %v1747, 0.0
      %v1764 = vmax.f32 %v1748, 0.0
      %v1765 = vmax.f32 %v1749, 0.0
      %v1766 = vmax.f32 %v1750, 0.0
      %v1767 = vmax.f32 %v1751, 0.0
      %v1768 = vmax.f32 %v1752, 0.0
      %v1769 = vmax.f32 %v1753, 0.0
      %v1770 = vmax.f32 %v1754, 0.0
      %v1771 = vmax.f32 %v1755, 0.0
      %v1772 = vmax.f32 %v1756, 0.0
      %1773 = vst.msk [vmem:[%s375] sm:$0xff] %vm401, %v1757
      %1774 = vst.msk [vmem:[%s375 + $0x8] sm:$0xff] %vm401, %v1758
      %1775 = vst.msk [vmem:[%s375 + $0x10] sm:$0xff] %vm401, %v1759
      %1776 = vst.msk [vmem:[%s375 + $0x18] sm:$0xff] %vm401, %v1760
      %1777 = vst.msk [vmem:[%s375 + $0x20] sm:$0xff] %vm401, %v1761
      %1778 = vst.msk [vmem:[%s375 + $0x28] sm:$0xff] %vm401, %v1762
      %1779 = vst.msk [vmem:[%s375 + $0x30] sm:$0xff] %vm401, %v1763
      %1780 = vst.msk [vmem:[%s375 + $0x38] sm:$0xff] %vm401, %v1764
      %1781 = vst.msk [vmem:[%s375 + $0x40] sm:$0xff] %vm401, %v1765
      %1782 = vst.msk [vmem:[%s375 + $0x48] sm:$0xff] %vm401, %v1766
      %1783 = vst.msk [vmem:[%s375 + $0x50] sm:$0xff] %vm401, %v1767
      %1784 = vst.msk [vmem:[%s375 + $0x58] sm:$0xff] %vm401, %v1768
      %1785 = vst.msk [vmem:[%s375 + $0x60] sm:$0xff] %vm401, %v1769
      %1786 = vst.msk [vmem:[%s375 + $0x68] sm:$0xff] %vm401, %v1770
      %1787 = vst.msk [vmem:[%s375 + $0x70] sm:$0xff] %vm401, %v1771
      %1788 = vst.msk [vmem:[%s375 + $0x78] sm:$0xff] %vm401, %v1772
      %s1789 = smul.u32 %s23, 2
      %s1790 = sadd.s32 %s1789, %s24
      %s1791 = smul.u32 16, %s1790
      %p1792 = scmp.lt.s32.totalorder %s1791, 63
      %s1793 = scalar_select %p1792, %s1791, 63
      %s1794 = smul.addr %s1793, 8
      %s1795 = scalar_lea.vmem %s8, %s1794
      // Predicated region
      $region53: #{tpu_custom_call.1} parent=51 // pred_check
        %p1796 = pneg %p239
      $region54: #{tpu_custom_call.1} parent=51 // pred_check_branch
        %1798 = sbr.rel (%p1796) target = $region56
      $region55: #{tpu_custom_call.1} parent=51 // pred_region
        %s1799 = smul.u32 %s23, 2
        %s1800 = sadd.s32 %s1799, %s24
        %s1801 = smul.u32 16, %s1800
      $region56: #{tpu_custom_call.1} parent=51 // pred_fallthru
        _
    $region52: #{tpu_custom_call.1} parent=5 // pred_fallthru
      _
    %p1802 = scmp.le.s32.totalorder 2, %s14
    // Predicated region
    $region57: #{tpu_custom_call.1} parent=5 // pred_check
      %p1803 = pneg %p1802
    $region58: #{tpu_custom_call.1} parent=5 // pred_check_branch
      %1805 = sbr.rel (%p1803) target = $region60
    $region59: #{tpu_custom_call.1} parent=5 // pred_region
      %s1806 = ssub.s32 %s14, 2
      // Predicated region
      $region61: #{tpu_custom_call.1} parent=59 // pred_check
        %p1807 = pneg %p245
      $region62: #{tpu_custom_call.1} parent=59 // pred_check_branch
        %1809 = sbr.rel (%p1807) target = $region64
      $region63: #{tpu_custom_call.1} parent=59 // pred_region
        %s1810 = smul.u32 %s25, 2
        %s1811 = sadd.s32 %s1810, %s26
        %s1812 = smul.u32 16, %s1811
        %p1813 = scmp.lt.s32.totalorder %s1812, 63
        %s1814 = scalar_select %p1813, %s1812, 63
        %s1815 = smul.addr %s1814, 8
        %s1816 = scalar_lea.vmem %s8, %s1815
      $region64: #{tpu_custom_call.1} parent=59 // pred_fallthru
        _
    $region60: #{tpu_custom_call.1} parent=5 // pred_fallthru
      _
  $region6: #{tpu_custom_call.1} parent=0 // loop_footer
    %s18 = sadd.s32 1, %s14
  $region7: #{tpu_custom_call.1} parent=0 // loop_footer_branch
    %13 = sbr.rel target = $region3
  $region8: #{tpu_custom_call.1} parent=0 // loop_exit
    _

</llo_original>
